<compile_context>
chip_gen: v6e
topology: v6e:2x2x1
jax: 0.10.0
libtpu: 0.0.40
codegen_flags: <defaults>
</compile_context>

<pallas_src>
import jax
import jax.numpy as jnp
from jax.experimental import pallas as pl
from jax.experimental.pallas import tpu as pltpu


_VMEM_LIMIT_BYTES = 56 * 1024 * 1024   # explicit scoped-VMEM limit (< v7x 64 MiB)
_VMEM_TILE_BUDGET = 40 * 1024 * 1024   # what we let our own tiles consume


def _round_up(x, m):
    return ((x + m - 1) // m) * m


def _num_tensorcores():
    """2 on chips with two TensorCores per device (v7x / megacore), else 1."""
    try:
        kind = jax.devices()[0].device_kind.lower()
    except Exception:
        return 1
    return 2 if any(t in kind for t in ("v7", "tpu7", "v4", "v5p")) else 1


def _pick_tiling(B, D, r_pad, l_pad, mm_bytes, out_bytes, min_tiles):
    """Largest row tile that fits the VMEM budget and yields >= min_tiles steps."""
    npad = r_pad + l_pad
    # Grid-invariant operands (single-buffered): [W^T|C^T], V^T, biases.
    weight_bytes = D * npad * mm_bytes + r_pad * l_pad * mm_bytes + npad * 4

    def fits(tm):
        per_tile = (2 * tm * D * mm_bytes          # x, double-buffered
                    + 2 * tm * l_pad * out_bytes   # output, double-buffered
                    + tm * npad * 4)               # f32 hc intermediate
        return weight_bytes + per_tile <= _VMEM_TILE_BUDGET

    tm = _round_up(max(1, -(-B // min_tiles)), 8)  # ceil(B/min_tiles), mult of 8
    while tm > 8 and not fits(tm):
        tm = _round_up(tm // 2, 8)
    assert tm % 8 == 0, "row tile must be a multiple of 8 (sublane rule)"
    B_pad = _round_up(B, tm)
    return tm, B_pad


def relu_linear_skip_kernel(x_ref, wcT_ref, bw_ref, vT_ref, bvc_ref, o_ref):
    x = x_ref[...]                                               # (tm, D)
    # Fused first-layer + skip matmul: x @ [W^T | C^T] -> (tm, r_pad + l_pad).
    hc = jnp.dot(x, wcT_ref[...], preferred_element_type=jnp.float32)
    r_pad = vT_ref.shape[0]
    h = jnp.maximum(hc[:, :r_pad] + bw_ref[...], 0.0)            # ReLU branch (f32)
    skip = hc[:, r_pad:]                                         # skip branch (f32)
    out2 = jnp.dot(h.astype(vT_ref.dtype), vT_ref[...],
                   preferred_element_type=jnp.float32)
    o_ref[...] = (out2 + skip + bvc_ref[...]).astype(o_ref.dtype)


def _build_call(tm, B_pad, D, r_pad, l_pad, out_dtype, mm_dtype,
                single_buffer_weights, with_cost):
    npad = r_pad + l_pad

    def weight_spec(shape):
        if single_buffer_weights:
            return pl.BlockSpec(shape, lambda i: (0, 0),
                                pipeline_mode=pl.Buffered(1))
        return pl.BlockSpec(shape, lambda i: (0, 0))

    in_specs = [
        pl.BlockSpec((tm, D), lambda i: (i, 0)),   # x tile (only streamed operand)
        weight_spec((D, npad)),                    # fused [W^T | C^T]
        weight_spec((1, r_pad)),                   # bW
        weight_spec((r_pad, l_pad)),               # V^T
        weight_spec((1, l_pad)),                   # bV + bC (pre-summed)
    ]

    kwargs = {}
    if with_cost:
        mm_b = jnp.dtype(mm_dtype).itemsize
        out_b = jnp.dtype(out_dtype).itemsize
        flops = 2 * B_pad * D * npad + 2 * B_pad * r_pad * l_pad
        bytes_accessed = (B_pad * D * mm_b                  # x
                          + D * npad * mm_b                 # [W^T|C^T]
                          + r_pad * l_pad * mm_b            # V^T
                          + (2 * npad) * 4                  # biases
                          + B_pad * l_pad * out_b)          # output
        kwargs["cost_estimate"] = pl.CostEstimate(
            flops=flops, transcendentals=0, bytes_accessed=bytes_accessed)

    return pl.pallas_call(
        relu_linear_skip_kernel,
        out_shape=jax.ShapeDtypeStruct((B_pad, l_pad), out_dtype),
        grid_spec=pltpu.PrefetchScalarGridSpec(
            num_scalar_prefetch=0,
            grid=(B_pad // tm,),
            in_specs=in_specs,
            out_specs=pl.BlockSpec((tm, l_pad), lambda i: (i, 0)),
        ),
        compiler_params=pltpu.CompilerParams(
            dimension_semantics=(pltpu.PARALLEL,),
            vmem_limit_bytes=_VMEM_LIMIT_BYTES),
        **kwargs,
    )


def make_relu_linear_skip(W, bW, V, bV, C, bC, *, use_bf16=True,
                          out_dtype=jnp.float32, min_row_tiles=None):
    """Hoisted weight packing; returns apply(x) -> [B, l]."""
    r, D = W.shape
    l = V.shape[0]
    mm_dtype = jnp.bfloat16 if use_bf16 else jnp.float32
    r_pad = _round_up(r, 128)
    l_pad = _round_up(l, 128)

    # --- one-time layout prep (zero-padded lanes stay exactly zero) ---------
    wT = jnp.zeros((D, r_pad), jnp.float32).at[:, :r].set(W.T.astype(jnp.float32))
    cT = jnp.zeros((D, l_pad), jnp.float32).at[:, :l].set(C.T.astype(jnp.float32))
    wcT = jnp.concatenate([wT, cT], axis=1).astype(mm_dtype)      # [D, r_pad+l_pad]
    vT = (jnp.zeros((r_pad, l_pad), jnp.float32)
          .at[:r, :l].set(V.T.astype(jnp.float32)).astype(mm_dtype))
    bw = jnp.zeros((1, r_pad), jnp.float32).at[0, :r].set(bW.astype(jnp.float32))
    bvc = jnp.zeros((1, l_pad), jnp.float32).at[0, :l].set(
        (bV + bC).astype(jnp.float32))
    packed = (wcT, bw, vT, bvc)

    if min_row_tiles is None:
        min_row_tiles = _num_tensorcores()

    mm_bytes = jnp.dtype(mm_dtype).itemsize
    out_bytes = jnp.dtype(out_dtype).itemsize

    def apply(x):
        B = x.shape[0]
        tm, B_pad = _pick_tiling(B, D, r_pad, l_pad, mm_bytes, out_bytes,
                                 min_row_tiles)
        x_in = x.astype(mm_dtype)
        if B_pad != B:
            # Only triggers when B is not tile-aligned (not the common case).
            x_in = jnp.zeros((B_pad, D), mm_dtype).at[:B].set(x_in)
        try:
            f = _build_call(tm, B_pad, D, r_pad, l_pad, out_dtype, mm_dtype,
                            single_buffer_weights=True, with_cost=True)
            out = f(x_in, *packed)
        except Exception:
            # Fallback: default double-buffered weight specs, no cost hint.
            f = _build_call(tm, B_pad, D, r_pad, l_pad, out_dtype, mm_dtype,
                            single_buffer_weights=False, with_cost=False)
            out = f(x_in, *packed)
        return out[:B, :l]

    return apply


def reference(x, W, bW, V, bV, C, bC):
    out1 = jnp.maximum(x @ W.T + bW, 0.0)
    out2 = out1 @ V.T + bV
    skip = x @ C.T + bC
    return out2 + skip


if __name__ == "__main__":
    # Module hyperparameters (small, deterministic).
    B, D, R, L = 256, 32, 64, 32

    key = jax.random.PRNGKey(0)
    kx, kW, kbW, kV, kbV, kC, kbC = jax.random.split(key, 7)

    x = jax.random.normal(kx, (B, D), dtype=jnp.float32)

    # torch.nn.init.uniform_ on weights -> U[0, 1); biases keep torch's default
    # Linear init U(-1/sqrt(fan_in), 1/sqrt(fan_in)).
    W = jax.random.uniform(kW, (R, D), dtype=jnp.float32)
    bW = jax.random.uniform(kbW, (R,), dtype=jnp.float32,
                            minval=-float(D) ** -0.5, maxval=float(D) ** -0.5)
    V = jax.random.uniform(kV, (L, R), dtype=jnp.float32)
    bV = jax.random.uniform(kbV, (L,), dtype=jnp.float32,
                            minval=-float(R) ** -0.5, maxval=float(R) ** -0.5)
    C = jax.random.uniform(kC, (L, D), dtype=jnp.float32)
    bC = jax.random.uniform(kbC, (L,), dtype=jnp.float32,
                            minval=-float(D) ** -0.5, maxval=float(D) ** -0.5)

    ref = reference(x, W, bW, V, bV, C, bC)

    # f32 path: strict reference check.
    apply_f32 = make_relu_linear_skip(W, bW, V, bV, C, bC, use_bf16=False)
    out_f32 = jax.block_until_ready(apply_f32(x))
    assert out_f32.shape == (B, L)
    assert jnp.allclose(out_f32, ref, atol=1e-5, rtol=1e-5), "f32 mismatch"

    # bf16 streamed-operand path (default; halves HBM/VMEM bytes): loose check.
    apply_bf16 = make_relu_linear_skip(W, bW, V, bV, C, bC, use_bf16=True)
    out_bf16 = jax.block_until_ready(apply_bf16(x))
    assert out_bf16.shape == (B, L)
    rel_err = jnp.max(jnp.abs(out_bf16 - ref)) / (jnp.max(jnp.abs(ref)) + 1e-6)
    assert float(rel_err) < 5e-2, f"bf16 mismatch: rel_err={float(rel_err)}"

    print("KERNEL_OK")
</pallas_src>

<mosaic_0001>
module attributes {stable_mosaic.version = 11 : i64} {
  func.func @relu_linear_skip_kernel(%arg0: i32, %arg1: memref<256x32xf32, #tpu.memory_space<vmem>>, %arg2: memref<32x256xf32, #tpu.memory_space<vmem>>, %arg3: memref<1x128xf32, #tpu.memory_space<vmem>>, %arg4: memref<128x128xf32, #tpu.memory_space<vmem>>, %arg5: memref<1x128xf32, #tpu.memory_space<vmem>>, %arg6: memref<256x128xf32, #tpu.memory_space<vmem>>) attributes {dimension_semantics = [#tpu.dimension_semantics<parallel>], iteration_bounds = array<i64: 1>, scalar_prefetch = 0 : i64, scratch_operands = 0 : i64, tpu.core_type = #tpu.core_type<tc>, window_params = [{transform_indices = @transform_0, window_bounds = array<i64: 256, 32>}, {pipeline_mode = #tpu.pipeline_mode<synchronous>, transform_indices = @transform_1, window_bounds = array<i64: 32, 256>}, {pipeline_mode = #tpu.pipeline_mode<synchronous>, transform_indices = @transform_2, window_bounds = array<i64: 1, 128>}, {pipeline_mode = #tpu.pipeline_mode<synchronous>, transform_indices = @transform_3, window_bounds = array<i64: 128, 128>}, {pipeline_mode = #tpu.pipeline_mode<synchronous>, transform_indices = @transform_4, window_bounds = array<i64: 1, 128>}, {transform_indices = @transform_5, window_bounds = array<i64: 256, 128>}]} {
    %c0 = arith.constant 0 : index
    %c0_0 = arith.constant 0 : index
    %0 = vector.load %arg1[%c0, %c0_0] : memref<256x32xf32, #tpu.memory_space<vmem>>, vector<256x32xf32>
    %c0_1 = arith.constant 0 : index
    %c0_2 = arith.constant 0 : index
    %1 = vector.load %arg2[%c0_1, %c0_2] : memref<32x256xf32, #tpu.memory_space<vmem>>, vector<32x256xf32>
    %cst = arith.constant dense<0.000000e+00> : vector<256x256xf32>
    %2 = tpu.matmul %0, %1, %cst {dimension_numbers = #tpu.dot_dimension_numbers<[1], [0], [0], [1], [0, 0, 1, 1], [], []>} : vector<256x32xf32>, vector<32x256xf32>, vector<256x256xf32> -> vector<256x256xf32>
    %3 = vector.extract_strided_slice %2 {offsets = [0, 0], sizes = [256, 128], strides = [1, 1]} : vector<256x256xf32> to vector<256x128xf32>
    %c0_3 = arith.constant 0 : index
    %c0_4 = arith.constant 0 : index
    %4 = vector.load %arg3[%c0_3, %c0_4] : memref<1x128xf32, #tpu.memory_space<vmem>>, vector<1x128xf32>
    %5 = vector.broadcast %4 : vector<1x128xf32> to vector<256x128xf32>
    %6 = arith.addf %3, %5 : vector<256x128xf32>
    %cst_5 = arith.constant 0.000000e+00 : f32
    %7 = vector.broadcast %cst_5 : f32 to vector<256x128xf32>
    %8 = arith.maximumf %6, %7 : vector<256x128xf32>
    %9 = vector.extract_strided_slice %2 {offsets = [0, 128], sizes = [256, 128], strides = [1, 1]} : vector<256x256xf32> to vector<256x128xf32>
    %c0_6 = arith.constant 0 : index
    %c0_7 = arith.constant 0 : index
    %10 = vector.load %arg4[%c0_6, %c0_7] : memref<128x128xf32, #tpu.memory_space<vmem>>, vector<128x128xf32>
    %cst_8 = arith.constant dense<0.000000e+00> : vector<256x128xf32>
    %11 = tpu.matmul %8, %10, %cst_8 {dimension_numbers = #tpu.dot_dimension_numbers<[1], [0], [0], [1], [0, 0, 1, 1], [], []>} : vector<256x128xf32>, vector<128x128xf32>, vector<256x128xf32> -> vector<256x128xf32>
    %12 = arith.addf %11, %9 : vector<256x128xf32>
    %c0_9 = arith.constant 0 : index
    %c0_10 = arith.constant 0 : index
    %13 = vector.load %arg5[%c0_9, %c0_10] : memref<1x128xf32, #tpu.memory_space<vmem>>, vector<1x128xf32>
    %14 = vector.broadcast %13 : vector<1x128xf32> to vector<256x128xf32>
    %15 = arith.addf %12, %14 : vector<256x128xf32>
    %c0_11 = arith.constant 0 : index
    %c0_12 = arith.constant 0 : index
    %16 = vector.load %arg6[%c0_11, %c0_12] : memref<256x128xf32, #tpu.memory_space<vmem>>, vector<256x128xf32>
    tpu.vector_store %arg6[%c0_11, %c0_12], %15 {strides = array<i32>} : memref<256x128xf32, #tpu.memory_space<vmem>>, vector<256x128xf32>,
    return
  }
  func.func @transform_0(%arg0: i32) -> (i32, i32) {
    %c0_i32 = arith.constant 0 : i32
    %c0_i32_0 = arith.constant 0 : i32
    return %arg0, %c0_i32 : i32, i32
  }
  func.func @transform_1(%arg0: i32) -> (i32, i32) {
    %c0_i32 = arith.constant 0 : i32
    %c0_i32_0 = arith.constant 0 : i32
    %c0_i32_1 = arith.constant 0 : i32
    return %c0_i32, %c0_i32_0 : i32, i32
  }
  func.func @transform_2(%arg0: i32) -> (i32, i32) {
    %c0_i32 = arith.constant 0 : i32
    %c0_i32_0 = arith.constant 0 : i32
    %c0_i32_1 = arith.constant 0 : i32
    return %c0_i32, %c0_i32_0 : i32, i32
  }
  func.func @transform_3(%arg0: i32) -> (i32, i32) {
    %c0_i32 = arith.constant 0 : i32
    %c0_i32_0 = arith.constant 0 : i32
    %c0_i32_1 = arith.constant 0 : i32
    return %c0_i32, %c0_i32_0 : i32, i32
  }
  func.func @transform_4(%arg0: i32) -> (i32, i32) {
    %c0_i32 = arith.constant 0 : i32
    %c0_i32_0 = arith.constant 0 : i32
    %c0_i32_1 = arith.constant 0 : i32
    return %c0_i32, %c0_i32_0 : i32, i32
  }
  func.func @transform_5(%arg0: i32) -> (i32, i32) {
    %c0_i32 = arith.constant 0 : i32
    %c0_i32_0 = arith.constant 0 : i32
    return %arg0, %c0_i32 : i32, i32
  }
}

module attributes {stable_mosaic.version = 11 : i64} {
  func.func @relu_linear_skip_kernel(%arg0: i32, %arg1: memref<256x32xf32, #tpu.memory_space<vmem>>, %arg2: memref<32x256xf32, #tpu.memory_space<vmem>>, %arg3: memref<1x128xf32, #tpu.memory_space<vmem>>, %arg4: memref<128x128xf32, #tpu.memory_space<vmem>>, %arg5: memref<1x128xf32, #tpu.memory_space<vmem>>, %arg6: memref<256x128xf32, #tpu.memory_space<vmem>>) attributes {dimension_semantics = [#tpu.dimension_semantics<parallel>], iteration_bounds = array<i64: 1>, scalar_prefetch = 0 : i64, scratch_operands = 0 : i64, tpu.core_type = #tpu.core_type<tc>, window_params = [{transform_indices = @transform_0, window_bounds = array<i64: 256, 32>}, {pipeline_mode = #tpu.pipeline_mode<synchronous>, transform_indices = @transform_1, window_bounds = array<i64: 32, 256>}, {pipeline_mode = #tpu.pipeline_mode<synchronous>, transform_indices = @transform_2, window_bounds = array<i64: 1, 128>}, {pipeline_mode = #tpu.pipeline_mode<synchronous>, transform_indices = @transform_3, window_bounds = array<i64: 128, 128>}, {pipeline_mode = #tpu.pipeline_mode<synchronous>, transform_indices = @transform_4, window_bounds = array<i64: 1, 128>}, {transform_indices = @transform_5, window_bounds = array<i64: 256, 128>}]} {
    %c0 = arith.constant 0 : index
    %c0_0 = arith.constant 0 : index
    %0 = vector.load %arg1[%c0, %c0_0] : memref<256x32xf32, #tpu.memory_space<vmem>>, vector<256x32xf32>
    %c0_1 = arith.constant 0 : index
    %c0_2 = arith.constant 0 : index
    %1 = vector.load %arg2[%c0_1, %c0_2] : memref<32x256xf32, #tpu.memory_space<vmem>>, vector<32x256xf32>
    %cst = arith.constant dense<0.000000e+00> : vector<256x256xf32>
    %2 = tpu.matmul %0, %1, %cst {dimension_numbers = #tpu.dot_dimension_numbers<[1], [0], [0], [1], [0, 0, 1, 1], [], []>} : vector<256x32xf32>, vector<32x256xf32>, vector<256x256xf32> -> vector<256x256xf32>
    %3 = vector.extract_strided_slice %2 {offsets = [0, 0], sizes = [256, 128], strides = [1, 1]} : vector<256x256xf32> to vector<256x128xf32>
    %c0_3 = arith.constant 0 : index
    %c0_4 = arith.constant 0 : index
    %4 = vector.load %arg3[%c0_3, %c0_4] : memref<1x128xf32, #tpu.memory_space<vmem>>, vector<1x128xf32>
    %5 = vector.broadcast %4 : vector<1x128xf32> to vector<256x128xf32>
    %6 = arith.addf %3, %5 : vector<256x128xf32>
    %cst_5 = arith.constant 0.000000e+00 : f32
    %7 = vector.broadcast %cst_5 : f32 to vector<256x128xf32>
    %8 = arith.maximumf %6, %7 : vector<256x128xf32>
    %9 = vector.extract_strided_slice %2 {offsets = [0, 128], sizes = [256, 128], strides = [1, 1]} : vector<256x256xf32> to vector<256x128xf32>
    %c0_6 = arith.constant 0 : index
    %c0_7 = arith.constant 0 : index
    %10 = vector.load %arg4[%c0_6, %c0_7] : memref<128x128xf32, #tpu.memory_space<vmem>>, vector<128x128xf32>
    %cst_8 = arith.constant dense<0.000000e+00> : vector<256x128xf32>
    %11 = tpu.matmul %8, %10, %cst_8 {dimension_numbers = #tpu.dot_dimension_numbers<[1], [0], [0], [1], [0, 0, 1, 1], [], []>} : vector<256x128xf32>, vector<128x128xf32>, vector<256x128xf32> -> vector<256x128xf32>
    %12 = arith.addf %11, %9 : vector<256x128xf32>
    %c0_9 = arith.constant 0 : index
    %c0_10 = arith.constant 0 : index
    %13 = vector.load %arg5[%c0_9, %c0_10] : memref<1x128xf32, #tpu.memory_space<vmem>>, vector<1x128xf32>
    %14 = vector.broadcast %13 : vector<1x128xf32> to vector<256x128xf32>
    %15 = arith.addf %12, %14 : vector<256x128xf32>
    %c0_11 = arith.constant 0 : index
    %c0_12 = arith.constant 0 : index
    %16 = vector.load %arg6[%c0_11, %c0_12] : memref<256x128xf32, #tpu.memory_space<vmem>>, vector<256x128xf32>
    tpu.vector_store %arg6[%c0_11, %c0_12], %15 {strides = array<i32>} : memref<256x128xf32, #tpu.memory_space<vmem>>, vector<256x128xf32>,
    return
  }
  func.func @transform_0(%arg0: i32) -> (i32, i32) {
    %c0_i32 = arith.constant 0 : i32
    %c0_i32_0 = arith.constant 0 : i32
    return %arg0, %c0_i32 : i32, i32
  }
  func.func @transform_1(%arg0: i32) -> (i32, i32) {
    %c0_i32 = arith.constant 0 : i32
    %c0_i32_0 = arith.constant 0 : i32
    %c0_i32_1 = arith.constant 0 : i32
    return %c0_i32, %c0_i32_0 : i32, i32
  }
  func.func @transform_2(%arg0: i32) -> (i32, i32) {
    %c0_i32 = arith.constant 0 : i32
    %c0_i32_0 = arith.constant 0 : i32
    %c0_i32_1 = arith.constant 0 : i32
    return %c0_i32, %c0_i32_0 : i32, i32
  }
  func.func @transform_3(%arg0: i32) -> (i32, i32) {
    %c0_i32 = arith.constant 0 : i32
    %c0_i32_0 = arith.constant 0 : i32
    %c0_i32_1 = arith.constant 0 : i32
    return %c0_i32, %c0_i32_0 : i32, i32
  }
  func.func @transform_4(%arg0: i32) -> (i32, i32) {
    %c0_i32 = arith.constant 0 : i32
    %c0_i32_0 = arith.constant 0 : i32
    %c0_i32_1 = arith.constant 0 : i32
    return %c0_i32, %c0_i32_0 : i32, i32
  }
  func.func @transform_5(%arg0: i32) -> (i32, i32) {
    %c0_i32 = arith.constant 0 : i32
    %c0_i32_0 = arith.constant 0 : i32
    return %arg0, %c0_i32 : i32, i32
  }
}

</mosaic_0001>

<llo_original>
// kernel: tpu_custom_call.1
$region0: #{tpu_custom_call.1}
  #allocation0 [shape = 'u32[]', space=smem, size = 0x4, offset = 0x4, fixed_abs, tag = 'smem constant byte address 0x4 - core index']
  #allocation1 [shape = 'u32[144,128]{1,0:T(1,128)}', space=vmem, size = 0x12000, scoped, tag = 'internal scratch']
  %s0 = inlined_call_operand.vmem [shape: f32[256,32], index: 0, kind: input, shape index: {}]
  %s1 = inlined_call_operand.vmem [shape: f32[32,256], index: 1, kind: input, shape index: {}]
  %s2 = inlined_call_operand.vmem [shape: f32[1,128], index: 2, kind: input, shape index: {}]
  %s3 = inlined_call_operand.vmem [shape: f32[128,128], index: 3, kind: input, shape index: {}]
  %s4 = inlined_call_operand.vmem [shape: f32[1,128], index: 4, kind: input, shape index: {}]
  %s5 = inlined_call_operand.hbm [shape: f32[256,128], index: 5, kind: output, shape index: {}]
  %s6 = sld [smem:[#allocation0]]
  $region30: #{tpu_custom_call.1} parent=0
    _
  %s8 = ssub.s32 1, %s6
  %s9 = scalar_select 0, %s8, %s6
  $region1: #{tpu_custom_call.1} parent=0
    #allocation2 [shape = 'u8[131072]{0}', space=vmem, size = 0x20000, scoped, tag = 'output window, operand 0, single buffered']
    #allocation3 [shape = 's32[1]{0}', space=sflag, size = 0x4, scoped, tag = 'scoped memory for tpu_custom_call.1']
    %10 = vsyncpa [#allocation3], 0
    // Predicated region
    $region2: #{tpu_custom_call.1} parent=1 // pred_check
      _
    $region3: #{tpu_custom_call.1} parent=1 // pred_check_branch
      %12 = sbr.rel (0) target = $region5
    $region4: #{tpu_custom_call.1} parent=1 // pred_region
      _
    $region5: #{tpu_custom_call.1} parent=1 // pred_fallthru
      _
    // Predicated region
    $region6: #{tpu_custom_call.1} parent=1 // pred_check
      _
    $region7: #{tpu_custom_call.1} parent=1 // pred_check_branch
      %14 = sbr.rel (0) target = $region9
    $region8: #{tpu_custom_call.1} parent=1 // pred_region
      _
    $region9: #{tpu_custom_call.1} parent=1 // pred_fallthru
      _
    // Predicated region
    $region10: #{tpu_custom_call.1} parent=1 // pred_check
      _
    $region11: #{tpu_custom_call.1} parent=1 // pred_check_branch
      %16 = sbr.rel (0) target = $region13
    $region12: #{tpu_custom_call.1} parent=1 // pred_region
      _
    $region13: #{tpu_custom_call.1} parent=1 // pred_fallthru
      _
    // Predicated region
    $region14: #{tpu_custom_call.1} parent=1 // pred_check
      _
    $region15: #{tpu_custom_call.1} parent=1 // pred_check_branch
      %18 = sbr.rel (0) target = $region17
    $region16: #{tpu_custom_call.1} parent=1 // pred_region
      _
    $region17: #{tpu_custom_call.1} parent=1 // pred_fallthru
      _
    // Predicated region
    $region18: #{tpu_custom_call.1} parent=1 // pred_check
      _
    $region19: #{tpu_custom_call.1} parent=1 // pred_check_branch
      %20 = sbr.rel (0) target = $region21
    $region20: #{tpu_custom_call.1} parent=1 // pred_region
      _
    $region21: #{tpu_custom_call.1} parent=1 // pred_fallthru
      _
    %v21 = vld [vmem:[%s0] sm:$0xff]
    %v22 = vld [vmem:[%s0 + $0x8] sm:$0xff]
    %v23 = vld [vmem:[%s0 + $0x10] sm:$0xff]
    %v24 = vld [vmem:[%s0 + $0x18] sm:$0xff]
    %v25 = vld [vmem:[%s0 + $0x20] sm:$0xff]
    %v26 = vld [vmem:[%s0 + $0x28] sm:$0xff]
    %v27 = vld [vmem:[%s0 + $0x30] sm:$0xff]
    %v28 = vld [vmem:[%s0 + $0x38] sm:$0xff]
    %v29 = vld [vmem:[%s0 + $0x40] sm:$0xff]
    %v30 = vld [vmem:[%s0 + $0x48] sm:$0xff]
    %v31 = vld [vmem:[%s0 + $0x50] sm:$0xff]
    %v32 = vld [vmem:[%s0 + $0x58] sm:$0xff]
    %v33 = vld [vmem:[%s0 + $0x60] sm:$0xff]
    %v34 = vld [vmem:[%s0 + $0x68] sm:$0xff]
    %v35 = vld [vmem:[%s0 + $0x70] sm:$0xff]
    %v36 = vld [vmem:[%s0 + $0x78] sm:$0xff]
    %v37 = vld [vmem:[%s0 + $0x80] sm:$0xff]
    %v38 = vld [vmem:[%s0 + $0x88] sm:$0xff]
    %v39 = vld [vmem:[%s0 + $0x90] sm:$0xff]
    %v40 = vld [vmem:[%s0 + $0x98] sm:$0xff]
    %v41 = vld [vmem:[%s0 + $0xa0] sm:$0xff]
    %v42 = vld [vmem:[%s0 + $0xa8] sm:$0xff]
    %v43 = vld [vmem:[%s0 + $0xb0] sm:$0xff]
    %v44 = vld [vmem:[%s0 + $0xb8] sm:$0xff]
    %v45 = vld [vmem:[%s0 + $0xc0] sm:$0xff]
    %v46 = vld [vmem:[%s0 + $0xc8] sm:$0xff]
    %v47 = vld [vmem:[%s0 + $0xd0] sm:$0xff]
    %v48 = vld [vmem:[%s0 + $0xd8] sm:$0xff]
    %v49 = vld [vmem:[%s0 + $0xe0] sm:$0xff]
    %v50 = vld [vmem:[%s0 + $0xe8] sm:$0xff]
    %v51 = vld [vmem:[%s0 + $0xf0] sm:$0xff]
    %v52 = vld [vmem:[%s0 + $0xf8] sm:$0xff]
    %v53 = vld [vmem:[%s1] sm:$0xff]
    %v54 = vld [vmem:[%s1 + $0x8] sm:$0xff]
    %v55 = vld [vmem:[%s1 + $0x10] sm:$0xff]
    %v56 = vld [vmem:[%s1 + $0x18] sm:$0xff]
    %v57 = vld [vmem:[%s1 + $0x20] sm:$0xff]
    %v58 = vld [vmem:[%s1 + $0x28] sm:$0xff]
    %v59 = vld [vmem:[%s1 + $0x30] sm:$0xff]
    %v60 = vld [vmem:[%s1 + $0x38] sm:$0xff]
    %vm61 = vcmask 261120
    %v63 = vsel %vm61, %v21, 0
    %v66 = vsel %vm61, %v22, 0
    %v69 = vsel %vm61, %v23, 0
    %v72 = vsel %vm61, %v24, 0
    %v75 = vsel %vm61, %v25, 0
    %v78 = vsel %vm61, %v26, 0
    %v81 = vsel %vm61, %v27, 0
    %v84 = vsel %vm61, %v28, 0
    %v87 = vsel %vm61, %v29, 0
    %v90 = vsel %vm61, %v30, 0
    %v93 = vsel %vm61, %v31, 0
    %v96 = vsel %vm61, %v32, 0
    %v99 = vsel %vm61, %v33, 0
    %v102 = vsel %vm61, %v34, 0
    %v105 = vsel %vm61, %v35, 0
    %v108 = vsel %vm61, %v36, 0
    %v111 = vsel %vm61, %v37, 0
    %v114 = vsel %vm61, %v38, 0
    %v117 = vsel %vm61, %v39, 0
    %v120 = vsel %vm61, %v40, 0
    %v123 = vsel %vm61, %v41, 0
    %v126 = vsel %vm61, %v42, 0
    %v129 = vsel %vm61, %v43, 0
    %v132 = vsel %vm61, %v44, 0
    %v135 = vsel %vm61, %v45, 0
    %v138 = vsel %vm61, %v46, 0
    %v141 = vsel %vm61, %v47, 0
    %v144 = vsel %vm61, %v48, 0
    %v147 = vsel %vm61, %v49, 0
    %v150 = vsel %vm61, %v50, 0
    %v153 = vsel %vm61, %v51, 0
    %v156 = vsel %vm61, %v52, 0
    %158 = vmatprep.subr.mxu0 0.0
    %159 = vmatpush1.msra.mxu0 0.0
    %160 = vmatprep.subr.mxu0 0.0
    %161 = vmatpush1.msra.mxu0 0.0
    %162 = vmatprep.subr.mxu0 0.0
    %163 = vmatpush1.msra.mxu0 0.0
    %164 = vmatprep.subr.mxu0 0.0
    %165 = vmatpush1.msra.mxu0 0.0
    %166 = vmatprep.subr.mxu0 0.0
    %167 = vmatpush1.msra.mxu0 0.0
    %168 = vmatprep.subr.mxu0 0.0
    %169 = vmatpush1.msra.mxu0 0.0
    %170 = vmatprep.subr.mxu0 0.0
    %171 = vmatpush1.msra.mxu0 0.0
    %172 = vmatprep.subr.mxu0 0.0
    %173 = vmatpush1.msra.mxu0 0.0
    %174 = vmatprep.subr.mxu0 0.0
    %175 = vmatpush1.msra.mxu0 0.0
    %176 = vmatprep.subr.mxu0 0.0
    %177 = vmatpush1.msra.mxu0 0.0
    %178 = vmatprep.subr.mxu0 0.0
    %179 = vmatpush1.msra.mxu0 0.0
    %180 = vmatprep.subr.mxu0 0.0
    %181 = vmatpush1.msra.mxu0 0.0
    %182 = vmatprep.subr.mxu0 %v60
    %183 = vmatpush1.msra.mxu0 %v59
    %184 = vmatprep.subr.mxu0 %v58
    %185 = vmatpush1.msra.mxu0 %v57
    %186 = vmatprep.subr.mxu0 %v56
    %187 = vmatpush1.msra.mxu0 %v55
    %188 = vmatprep.subr.mxu0 %v54
    %189 = vmatpush1.msra.mxu0 %v53
    %190 = vmatprep.subr.mxu0 0.0
    %191 = vmatpush2.msra.mxu0 0.0
    %192 = vmatprep.subr.mxu0 0.0
    %193 = vmatpush2.msra.mxu0 0.0
    %194 = vmatprep.subr.mxu0 0.0
    %195 = vmatpush2.msra.mxu0 0.0
    %196 = vmatprep.subr.mxu0 0.0
    %197 = vmatpush2.msra.mxu0 0.0
    %198 = vmatprep.subr.mxu0 0.0
    %199 = vmatpush2.msra.mxu0 0.0
    %200 = vmatprep.subr.mxu0 0.0
    %201 = vmatpush2.msra.mxu0 0.0
    %202 = vmatprep.subr.mxu0 0.0
    %203 = vmatpush2.msra.mxu0 0.0
    %204 = vmatprep.subr.mxu0 0.0
    %205 = vmatpush2.msra.mxu0 0.0
    %206 = vmatprep.subr.mxu0 0.0
    %207 = vmatpush2.msra.mxu0 0.0
    %208 = vmatprep.subr.mxu0 0.0
    %209 = vmatpush2.msra.mxu0 0.0
    %210 = vmatprep.subr.mxu0 0.0
    %211 = vmatpush2.msra.mxu0 0.0
    %212 = vmatprep.subr.mxu0 0.0
    %213 = vmatpush2.msra.mxu0 0.0
    %214 = vmatprep.subr.mxu0 0.0
    %215 = vmatpush2.msra.mxu0 0.0
    %216 = vmatprep.subr.mxu0 0.0
    %217 = vmatpush2.msra.mxu0 0.0
    %218 = vmatprep.subr.mxu0 0.0
    %219 = vmatpush2.msra.mxu0 0.0
    %220 = vmatprep.subr.mxu0 0.0
    %221 = vmatpush2.msra.mxu0 0.0
    %222 = vmatprep.mubr.f32.mxu0 0.0
    %223 = vmatmul.mubr.f32.gmra.mxu0 %v63
    %v224 = vpop.f32.mrf.mxu0
    %v225 = vadd.f32 0.0, %v224
    %v226 = vpop.f32.mrf.mxu0
    %v227 = vadd.f32 0.0, %v226
    %228 = vmatprep.mubr.f32.mxu0 0.0
    %229 = vmatmul.mubr.f32.gmra.mxu0 %v66
    %v230 = vpop.f32.mrf.mxu0
    %v231 = vadd.f32 0.0, %v230
    %v232 = vpop.f32.mrf.mxu0
    %v233 = vadd.f32 0.0, %v232
    %234 = vmatprep.mubr.f32.mxu0 0.0
    %235 = vmatmul.mubr.f32.gmra.mxu0 %v69
    %v236 = vpop.f32.mrf.mxu0
    %v237 = vadd.f32 0.0, %v236
    %v238 = vpop.f32.mrf.mxu0
    %v239 = vadd.f32 0.0, %v238
    %240 = vmatprep.mubr.f32.mxu0 0.0
    %241 = vmatmul.mubr.f32.gmra.mxu0 %v72
    %v242 = vpop.f32.mrf.mxu0
    %v243 = vadd.f32 0.0, %v242
    %v244 = vpop.f32.mrf.mxu0
    %v245 = vadd.f32 0.0, %v244
    %246 = vmatprep.mubr.f32.mxu0 0.0
    %247 = vmatmul.mubr.f32.gmra.mxu0 %v75
    %v248 = vpop.f32.mrf.mxu0
    %v249 = vadd.f32 0.0, %v248
    %v250 = vpop.f32.mrf.mxu0
    %v251 = vadd.f32 0.0, %v250
    %252 = vmatprep.mubr.f32.mxu0 0.0
    %253 = vmatmul.mubr.f32.gmra.mxu0 %v78
    %v254 = vpop.f32.mrf.mxu0
    %v255 = vadd.f32 0.0, %v254
    %v256 = vpop.f32.mrf.mxu0
    %v257 = vadd.f32 0.0, %v256
    %258 = vmatprep.mubr.f32.mxu0 0.0
    %259 = vmatmul.mubr.f32.gmra.mxu0 %v81
    %v260 = vpop.f32.mrf.mxu0
    %v261 = vadd.f32 0.0, %v260
    %v262 = vpop.f32.mrf.mxu0
    %v263 = vadd.f32 0.0, %v262
    %264 = vmatprep.mubr.f32.mxu0 0.0
    %265 = vmatmul.mubr.f32.gmra.mxu0 %v84
    %v266 = vpop.f32.mrf.mxu0
    %v267 = vadd.f32 0.0, %v266
    %v268 = vpop.f32.mrf.mxu0
    %v269 = vadd.f32 0.0, %v268
    %270 = vmatprep.mubr.f32.mxu0 0.0
    %271 = vmatmul.mubr.f32.gmra.mxu0 %v87
    %v272 = vpop.f32.mrf.mxu0
    %v273 = vadd.f32 0.0, %v272
    %v274 = vpop.f32.mrf.mxu0
    %v275 = vadd.f32 0.0, %v274
    %276 = vmatprep.mubr.f32.mxu0 0.0
    %277 = vmatmul.mubr.f32.gmra.mxu0 %v90
    %v278 = vpop.f32.mrf.mxu0
    %v279 = vadd.f32 0.0, %v278
    %v280 = vpop.f32.mrf.mxu0
    %v281 = vadd.f32 0.0, %v280
    %282 = vmatprep.mubr.f32.mxu0 0.0
    %283 = vmatmul.mubr.f32.gmra.mxu0 %v93
    %v284 = vpop.f32.mrf.mxu0
    %v285 = vadd.f32 0.0, %v284
    %v286 = vpop.f32.mrf.mxu0
    %v287 = vadd.f32 0.0, %v286
    %288 = vmatprep.mubr.f32.mxu0 0.0
    %289 = vmatmul.mubr.f32.gmra.mxu0 %v96
    %v290 = vpop.f32.mrf.mxu0
    %v291 = vadd.f32 0.0, %v290
    %v292 = vpop.f32.mrf.mxu0
    %v293 = vadd.f32 0.0, %v292
    %294 = vmatprep.mubr.f32.mxu0 0.0
    %295 = vmatmul.mubr.f32.gmra.mxu0 %v99
    %v296 = vpop.f32.mrf.mxu0
    %v297 = vadd.f32 0.0, %v296
    %v298 = vpop.f32.mrf.mxu0
    %v299 = vadd.f32 0.0, %v298
    %300 = vmatprep.mubr.f32.mxu0 0.0
    %301 = vmatmul.mubr.f32.gmra.mxu0 %v102
    %v302 = vpop.f32.mrf.mxu0
    %v303 = vadd.f32 0.0, %v302
    %v304 = vpop.f32.mrf.mxu0
    %v305 = vadd.f32 0.0, %v304
    %306 = vmatprep.mubr.f32.mxu0 0.0
    %307 = vmatmul.mubr.f32.gmra.mxu0 %v105
    %v308 = vpop.f32.mrf.mxu0
    %v309 = vadd.f32 0.0, %v308
    %v310 = vpop.f32.mrf.mxu0
    %v311 = vadd.f32 0.0, %v310
    %312 = vmatprep.mubr.f32.mxu0 0.0
    %313 = vmatmul.mubr.f32.gmra.mxu0 %v108
    %v314 = vpop.f32.mrf.mxu0
    %v315 = vadd.f32 0.0, %v314
    %v316 = vpop.f32.mrf.mxu0
    %v317 = vadd.f32 0.0, %v316
    %318 = vmatprep.mubr.f32.mxu0 0.0
    %319 = vmatmul.mubr.f32.gmra.mxu0 %v111
    %v320 = vpop.f32.mrf.mxu0
    %v321 = vadd.f32 0.0, %v320
    %v322 = vpop.f32.mrf.mxu0
    %v323 = vadd.f32 0.0, %v322
    %324 = vmatprep.mubr.f32.mxu0 0.0
    %325 = vmatmul.mubr.f32.gmra.mxu0 %v114
    %v326 = vpop.f32.mrf.mxu0
    %v327 = vadd.f32 0.0, %v326
    %v328 = vpop.f32.mrf.mxu0
    %v329 = vadd.f32 0.0, %v328
    %330 = vmatprep.mubr.f32.mxu0 0.0
    %331 = vmatmul.mubr.f32.gmra.mxu0 %v117
    %v332 = vpop.f32.mrf.mxu0
    %v333 = vadd.f32 0.0, %v332
    %v334 = vpop.f32.mrf.mxu0
    %v335 = vadd.f32 0.0, %v334
    %336 = vmatprep.mubr.f32.mxu0 0.0
    %337 = vmatmul.mubr.f32.gmra.mxu0 %v120
    %v338 = vpop.f32.mrf.mxu0
    %v339 = vadd.f32 0.0, %v338
    %v340 = vpop.f32.mrf.mxu0
    %v341 = vadd.f32 0.0, %v340
    %342 = vmatprep.mubr.f32.mxu0 0.0
    %343 = vmatmul.mubr.f32.gmra.mxu0 %v123
    %v344 = vpop.f32.mrf.mxu0
    %v345 = vadd.f32 0.0, %v344
    %v346 = vpop.f32.mrf.mxu0
    %v347 = vadd.f32 0.0, %v346
    %348 = vmatprep.mubr.f32.mxu0 0.0
    %349 = vmatmul.mubr.f32.gmra.mxu0 %v126
    %v350 = vpop.f32.mrf.mxu0
    %v351 = vadd.f32 0.0, %v350
    %v352 = vpop.f32.mrf.mxu0
    %v353 = vadd.f32 0.0, %v352
    %354 = vmatprep.mubr.f32.mxu0 0.0
    %355 = vmatmul.mubr.f32.gmra.mxu0 %v129
    %v356 = vpop.f32.mrf.mxu0
    %v357 = vadd.f32 0.0, %v356
    %v358 = vpop.f32.mrf.mxu0
    %v359 = vadd.f32 0.0, %v358
    %360 = vmatprep.mubr.f32.mxu0 0.0
    %361 = vmatmul.mubr.f32.gmra.mxu0 %v132
    %v362 = vpop.f32.mrf.mxu0
    %v363 = vadd.f32 0.0, %v362
    %v364 = vpop.f32.mrf.mxu0
    %v365 = vadd.f32 0.0, %v364
    %366 = vmatprep.mubr.f32.mxu0 0.0
    %367 = vmatmul.mubr.f32.gmra.mxu0 %v135
    %v368 = vpop.f32.mrf.mxu0
    %v369 = vadd.f32 0.0, %v368
    %v370 = vpop.f32.mrf.mxu0
    %v371 = vadd.f32 0.0, %v370
    %372 = vmatprep.mubr.f32.mxu0 0.0
    %373 = vmatmul.mubr.f32.gmra.mxu0 %v138
    %v374 = vpop.f32.mrf.mxu0
    %v375 = vadd.f32 0.0, %v374
    %v376 = vpop.f32.mrf.mxu0
    %v377 = vadd.f32 0.0, %v376
    %378 = vmatprep.mubr.f32.mxu0 0.0
    %379 = vmatmul.mubr.f32.gmra.mxu0 %v141
    %v380 = vpop.f32.mrf.mxu0
    %v381 = vadd.f32 0.0, %v380
    %v382 = vpop.f32.mrf.mxu0
    %v383 = vadd.f32 0.0, %v382
    %384 = vmatprep.mubr.f32.mxu0 0.0
    %385 = vmatmul.mubr.f32.gmra.mxu0 %v144
    %v386 = vpop.f32.mrf.mxu0
    %v387 = vadd.f32 0.0, %v386
    %v388 = vpop.f32.mrf.mxu0
    %v389 = vadd.f32 0.0, %v388
    %390 = vmatprep.mubr.f32.mxu0 0.0
    %391 = vmatmul.mubr.f32.gmra.mxu0 %v147
    %v392 = vpop.f32.mrf.mxu0
    %v393 = vadd.f32 0.0, %v392
    %v394 = vpop.f32.mrf.mxu0
    %v395 = vadd.f32 0.0, %v394
    %396 = vmatprep.mubr.f32.mxu0 0.0
    %397 = vmatmul.mubr.f32.gmra.mxu0 %v150
    %v398 = vpop.f32.mrf.mxu0
    %v399 = vadd.f32 0.0, %v398
    %v400 = vpop.f32.mrf.mxu0
    %v401 = vadd.f32 0.0, %v400
    %402 = vmatprep.mubr.f32.mxu0 0.0
    %403 = vmatmul.mubr.f32.gmra.mxu0 %v153
    %v404 = vpop.f32.mrf.mxu0
    %v405 = vadd.f32 0.0, %v404
    %v406 = vpop.f32.mrf.mxu0
    %v407 = vadd.f32 0.0, %v406
    %408 = vmatprep.mubr.f32.mxu0 0.0
    %409 = vmatmul.mubr.f32.gmra.mxu0 %v156
    %v410 = vpop.f32.mrf.mxu0
    %v411 = vadd.f32 0.0, %v410
    %v412 = vpop.f32.mrf.mxu0
    %v413 = vadd.f32 0.0, %v412
    %414 = vdwg.mxu0
    %v415 = vld [vmem:[%s2] sm:$0x1]
    %v417 = vlaneseq
    %v418 = vshrl.u32 %v417, 7
    %v419 = vsub.s32 0, %v418
    %v420 = vrot.slane %v415, %v419
    %v422 = vadd.f32 %v225, %v420
    %v423 = vadd.f32 %v231, %v420
    %v424 = vadd.f32 %v237, %v420
    %v425 = vadd.f32 %v243, %v420
    %v426 = vadd.f32 %v249, %v420
    %v427 = vadd.f32 %v255, %v420
    %v428 = vadd.f32 %v261, %v420
    %v429 = vadd.f32 %v267, %v420
    %v430 = vadd.f32 %v273, %v420
    %v431 = vadd.f32 %v279, %v420
    %v432 = vadd.f32 %v285, %v420
    %v433 = vadd.f32 %v291, %v420
    %v434 = vadd.f32 %v297, %v420
    %v435 = vadd.f32 %v303, %v420
    %v436 = vadd.f32 %v309, %v420
    %v437 = vadd.f32 %v315, %v420
    %v438 = vadd.f32 %v321, %v420
    %v439 = vadd.f32 %v327, %v420
    %v440 = vadd.f32 %v333, %v420
    %v441 = vadd.f32 %v339, %v420
    %v442 = vadd.f32 %v345, %v420
    %v443 = vadd.f32 %v351, %v420
    %v444 = vadd.f32 %v357, %v420
    %v445 = vadd.f32 %v363, %v420
    %v446 = vadd.f32 %v369, %v420
    %v447 = vadd.f32 %v375, %v420
    %v448 = vadd.f32 %v381, %v420
    %v449 = vadd.f32 %v387, %v420
    %v450 = vadd.f32 %v393, %v420
    %v451 = vadd.f32 %v399, %v420
    %v452 = vadd.f32 %v405, %v420
    %v453 = vadd.f32 %v411, %v420
    %v454 = vmax.f32 %v422, 0.0
    %v455 = vmax.f32 %v423, 0.0
    %v456 = vmax.f32 %v424, 0.0
    %v457 = vmax.f32 %v425, 0.0
    %v458 = vmax.f32 %v426, 0.0
    %v459 = vmax.f32 %v427, 0.0
    %v460 = vmax.f32 %v428, 0.0
    %v461 = vmax.f32 %v429, 0.0
    %v462 = vmax.f32 %v430, 0.0
    %v463 = vmax.f32 %v431, 0.0
    %v464 = vmax.f32 %v432, 0.0
    %v465 = vmax.f32 %v433, 0.0
    %v466 = vmax.f32 %v434, 0.0
    %v467 = vmax.f32 %v435, 0.0
    %v468 = vmax.f32 %v436, 0.0
    %v469 = vmax.f32 %v437, 0.0
    %v470 = vmax.f32 %v438, 0.0
    %v471 = vmax.f32 %v439, 0.0
    %v472 = vmax.f32 %v440, 0.0
    %v473 = vmax.f32 %v441, 0.0
    %v474 = vmax.f32 %v442, 0.0
    %v475 = vmax.f32 %v443, 0.0
    %v476 = vmax.f32 %v444, 0.0
    %v477 = vmax.f32 %v445, 0.0
    %v478 = vmax.f32 %v446, 0.0
    %v479 = vmax.f32 %v447, 0.0
    %v480 = vmax.f32 %v448, 0.0
    %v481 = vmax.f32 %v449, 0.0
    %v482 = vmax.f32 %v450, 0.0
    %v483 = vmax.f32 %v451, 0.0
    %v484 = vmax.f32 %v452, 0.0
    %v485 = vmax.f32 %v453, 0.0
    %v486 = vld [vmem:[%s3] sm:$0xff]
    %v487 = vld [vmem:[%s3 + $0x8] sm:$0xff]
    %v488 = vld [vmem:[%s3 + $0x10] sm:$0xff]
    %v489 = vld [vmem:[%s3 + $0x18] sm:$0xff]
    %v490 = vld [vmem:[%s3 + $0x20] sm:$0xff]
    %v491 = vld [vmem:[%s3 + $0x28] sm:$0xff]
    %v492 = vld [vmem:[%s3 + $0x30] sm:$0xff]
    %v493 = vld [vmem:[%s3 + $0x38] sm:$0xff]
    %v494 = vld [vmem:[%s3 + $0x40] sm:$0xff]
    %v495 = vld [vmem:[%s3 + $0x48] sm:$0xff]
    %v496 = vld [vmem:[%s3 + $0x50] sm:$0xff]
    %v497 = vld [vmem:[%s3 + $0x58] sm:$0xff]
    %v498 = vld [vmem:[%s3 + $0x60] sm:$0xff]
    %v499 = vld [vmem:[%s3 + $0x68] sm:$0xff]
    %v500 = vld [vmem:[%s3 + $0x70] sm:$0xff]
    %v501 = vld [vmem:[%s3 + $0x78] sm:$0xff]
    %502 = vmatprep.subr.mxu0 0.0
    %503 = vmatpush1.msra.mxu0 %v501
    %504 = vmatprep.subr.mxu0 0.0
    %505 = vmatpush1.msra.mxu0 %v500
    %506 = vmatprep.subr.mxu0 0.0
    %507 = vmatpush1.msra.mxu0 %v499
    %508 = vmatprep.subr.mxu0 0.0
    %509 = vmatpush1.msra.mxu0 %v498
    %510 = vmatprep.subr.mxu0 0.0
    %511 = vmatpush1.msra.mxu0 %v497
    %512 = vmatprep.subr.mxu0 0.0
    %513 = vmatpush1.msra.mxu0 %v496
    %514 = vmatprep.subr.mxu0 0.0
    %515 = vmatpush1.msra.mxu0 %v495
    %516 = vmatprep.subr.mxu0 0.0
    %517 = vmatpush1.msra.mxu0 %v494
    %518 = vmatprep.subr.mxu0 0.0
    %519 = vmatpush1.msra.mxu0 %v493
    %520 = vmatprep.subr.mxu0 0.0
    %521 = vmatpush1.msra.mxu0 %v492
    %522 = vmatprep.subr.mxu0 0.0
    %523 = vmatpush1.msra.mxu0 %v491
    %524 = vmatprep.subr.mxu0 0.0
    %525 = vmatpush1.msra.mxu0 %v490
    %526 = vmatprep.subr.mxu0 0.0
    %527 = vmatpush1.msra.mxu0 %v489
    %528 = vmatprep.subr.mxu0 0.0
    %529 = vmatpush1.msra.mxu0 %v488
    %530 = vmatprep.subr.mxu0 0.0
    %531 = vmatpush1.msra.mxu0 %v487
    %532 = vmatprep.subr.mxu0 0.0
    %533 = vmatpush1.msra.mxu0 %v486
    %534 = vmatprep.subr.mxu0 0.0
    %535 = vmatpush2.msra.mxu0 0.0
    %536 = vmatprep.subr.mxu0 0.0
    %537 = vmatpush2.msra.mxu0 0.0
    %538 = vmatprep.subr.mxu0 0.0
    %539 = vmatpush2.msra.mxu0 0.0
    %540 = vmatprep.subr.mxu0 0.0
    %541 = vmatpush2.msra.mxu0 0.0
    %542 = vmatprep.subr.mxu0 0.0
    %543 = vmatpush2.msra.mxu0 0.0
    %544 = vmatprep.subr.mxu0 0.0
    %545 = vmatpush2.msra.mxu0 0.0
    %546 = vmatprep.subr.mxu0 0.0
    %547 = vmatpush2.msra.mxu0 0.0
    %548 = vmatprep.subr.mxu0 0.0
    %549 = vmatpush2.msra.mxu0 0.0
    %550 = vmatprep.subr.mxu0 0.0
    %551 = vmatpush2.msra.mxu0 0.0
    %552 = vmatprep.subr.mxu0 0.0
    %553 = vmatpush2.msra.mxu0 0.0
    %554 = vmatprep.subr.mxu0 0.0
    %555 = vmatpush2.msra.mxu0 0.0
    %556 = vmatprep.subr.mxu0 0.0
    %557 = vmatpush2.msra.mxu0 0.0
    %558 = vmatprep.subr.mxu0 0.0
    %559 = vmatpush2.msra.mxu0 0.0
    %560 = vmatprep.subr.mxu0 0.0
    %561 = vmatpush2.msra.mxu0 0.0
    %562 = vmatprep.subr.mxu0 0.0
    %563 = vmatpush2.msra.mxu0 0.0
    %564 = vmatprep.subr.mxu0 0.0
    %565 = vmatpush2.msra.mxu0 0.0
    %566 = vmatprep.mubr.f32.mxu0 0.0
    %567 = vmatmul.mubr.f32.gmra.mxu0 %v454
    %v568 = vpop.f32.mrf.mxu0
    %v569 = vadd.f32 %v227, %v568
    %v570 = vpop.f32.mrf.mxu0
    %571 = vmatprep.mubr.f32.mxu0 0.0
    %572 = vmatmul.mubr.f32.gmra.mxu0 %v455
    %v573 = vpop.f32.mrf.mxu0
    %v574 = vadd.f32 %v233, %v573
    %v575 = vpop.f32.mrf.mxu0
    %576 = vmatprep.mubr.f32.mxu0 0.0
    %577 = vmatmul.mubr.f32.gmra.mxu0 %v456
    %v578 = vpop.f32.mrf.mxu0
    %v579 = vadd.f32 %v239, %v578
    %v580 = vpop.f32.mrf.mxu0
    %581 = vmatprep.mubr.f32.mxu0 0.0
    %582 = vmatmul.mubr.f32.gmra.mxu0 %v457
    %v583 = vpop.f32.mrf.mxu0
    %v584 = vadd.f32 %v245, %v583
    %v585 = vpop.f32.mrf.mxu0
    %586 = vmatprep.mubr.f32.mxu0 0.0
    %587 = vmatmul.mubr.f32.gmra.mxu0 %v458
    %v588 = vpop.f32.mrf.mxu0
    %v589 = vadd.f32 %v251, %v588
    %v590 = vpop.f32.mrf.mxu0
    %591 = vmatprep.mubr.f32.mxu0 0.0
    %592 = vmatmul.mubr.f32.gmra.mxu0 %v459
    %v593 = vpop.f32.mrf.mxu0
    %v594 = vadd.f32 %v257, %v593
    %v595 = vpop.f32.mrf.mxu0
    %596 = vmatprep.mubr.f32.mxu0 0.0
    %597 = vmatmul.mubr.f32.gmra.mxu0 %v460
    %v598 = vpop.f32.mrf.mxu0
    %v599 = vadd.f32 %v263, %v598
    %v600 = vpop.f32.mrf.mxu0
    %601 = vmatprep.mubr.f32.mxu0 0.0
    %602 = vmatmul.mubr.f32.gmra.mxu0 %v461
    %v603 = vpop.f32.mrf.mxu0
    %v604 = vadd.f32 %v269, %v603
    %v605 = vpop.f32.mrf.mxu0
    %606 = vmatprep.mubr.f32.mxu0 0.0
    %607 = vmatmul.mubr.f32.gmra.mxu0 %v462
    %v608 = vpop.f32.mrf.mxu0
    %v609 = vadd.f32 %v275, %v608
    %v610 = vpop.f32.mrf.mxu0
    %611 = vmatprep.mubr.f32.mxu0 0.0
    %612 = vmatmul.mubr.f32.gmra.mxu0 %v463
    %v613 = vpop.f32.mrf.mxu0
    %v614 = vadd.f32 %v281, %v613
    %v615 = vpop.f32.mrf.mxu0
    %616 = vmatprep.mubr.f32.mxu0 0.0
    %617 = vmatmul.mubr.f32.gmra.mxu0 %v464
    %v618 = vpop.f32.mrf.mxu0
    %v619 = vadd.f32 %v287, %v618
    %v620 = vpop.f32.mrf.mxu0
    %621 = vmatprep.mubr.f32.mxu0 0.0
    %622 = vmatmul.mubr.f32.gmra.mxu0 %v465
    %v623 = vpop.f32.mrf.mxu0
    %v624 = vadd.f32 %v293, %v623
    %v625 = vpop.f32.mrf.mxu0
    %626 = vmatprep.mubr.f32.mxu0 0.0
    %627 = vmatmul.mubr.f32.gmra.mxu0 %v466
    %v628 = vpop.f32.mrf.mxu0
    %v629 = vadd.f32 %v299, %v628
    %v630 = vpop.f32.mrf.mxu0
    %631 = vmatprep.mubr.f32.mxu0 0.0
    %632 = vmatmul.mubr.f32.gmra.mxu0 %v467
    %v633 = vpop.f32.mrf.mxu0
    %v634 = vadd.f32 %v305, %v633
    %v635 = vpop.f32.mrf.mxu0
    %636 = vmatprep.mubr.f32.mxu0 0.0
    %637 = vmatmul.mubr.f32.gmra.mxu0 %v468
    %v638 = vpop.f32.mrf.mxu0
    %v639 = vadd.f32 %v311, %v638
    %v640 = vpop.f32.mrf.mxu0
    %641 = vmatprep.mubr.f32.mxu0 0.0
    %642 = vmatmul.mubr.f32.gmra.mxu0 %v469
    %v643 = vpop.f32.mrf.mxu0
    %v644 = vadd.f32 %v317, %v643
    %v645 = vpop.f32.mrf.mxu0
    %646 = vmatprep.mubr.f32.mxu0 0.0
    %647 = vmatmul.mubr.f32.gmra.mxu0 %v470
    %v648 = vpop.f32.mrf.mxu0
    %v649 = vadd.f32 %v323, %v648
    %v650 = vpop.f32.mrf.mxu0
    %651 = vmatprep.mubr.f32.mxu0 0.0
    %652 = vmatmul.mubr.f32.gmra.mxu0 %v471
    %v653 = vpop.f32.mrf.mxu0
    %v654 = vadd.f32 %v329, %v653
    %v655 = vpop.f32.mrf.mxu0
    %656 = vmatprep.mubr.f32.mxu0 0.0
    %657 = vmatmul.mubr.f32.gmra.mxu0 %v472
    %v658 = vpop.f32.mrf.mxu0
    %v659 = vadd.f32 %v335, %v658
    %v660 = vpop.f32.mrf.mxu0
    %661 = vmatprep.mubr.f32.mxu0 0.0
    %662 = vmatmul.mubr.f32.gmra.mxu0 %v473
    %v663 = vpop.f32.mrf.mxu0
    %v664 = vadd.f32 %v341, %v663
    %v665 = vpop.f32.mrf.mxu0
    %666 = vmatprep.mubr.f32.mxu0 0.0
    %667 = vmatmul.mubr.f32.gmra.mxu0 %v474
    %v668 = vpop.f32.mrf.mxu0
    %v669 = vadd.f32 %v347, %v668
    %v670 = vpop.f32.mrf.mxu0
    %671 = vmatprep.mubr.f32.mxu0 0.0
    %672 = vmatmul.mubr.f32.gmra.mxu0 %v475
    %v673 = vpop.f32.mrf.mxu0
    %v674 = vadd.f32 %v353, %v673
    %v675 = vpop.f32.mrf.mxu0
    %676 = vmatprep.mubr.f32.mxu0 0.0
    %677 = vmatmul.mubr.f32.gmra.mxu0 %v476
    %v678 = vpop.f32.mrf.mxu0
    %v679 = vadd.f32 %v359, %v678
    %v680 = vpop.f32.mrf.mxu0
    %681 = vmatprep.mubr.f32.mxu0 0.0
    %682 = vmatmul.mubr.f32.gmra.mxu0 %v477
    %v683 = vpop.f32.mrf.mxu0
    %v684 = vadd.f32 %v365, %v683
    %v685 = vpop.f32.mrf.mxu0
    %686 = vmatprep.mubr.f32.mxu0 0.0
    %687 = vmatmul.mubr.f32.gmra.mxu0 %v478
    %v688 = vpop.f32.mrf.mxu0
    %v689 = vadd.f32 %v371, %v688
    %v690 = vpop.f32.mrf.mxu0
    %691 = vmatprep.mubr.f32.mxu0 0.0
    %692 = vmatmul.mubr.f32.gmra.mxu0 %v479
    %v693 = vpop.f32.mrf.mxu0
    %v694 = vadd.f32 %v377, %v693
    %v695 = vpop.f32.mrf.mxu0
    %696 = vmatprep.mubr.f32.mxu0 0.0
    %697 = vmatmul.mubr.f32.gmra.mxu0 %v480
    %v698 = vpop.f32.mrf.mxu0
    %v699 = vadd.f32 %v383, %v698
    %v700 = vpop.f32.mrf.mxu0
    %701 = vmatprep.mubr.f32.mxu0 0.0
    %702 = vmatmul.mubr.f32.gmra.mxu0 %v481
    %v703 = vpop.f32.mrf.mxu0
    %v704 = vadd.f32 %v389, %v703
    %v705 = vpop.f32.mrf.mxu0
    %706 = vmatprep.mubr.f32.mxu0 0.0
    %707 = vmatmul.mubr.f32.gmra.mxu0 %v482
    %v708 = vpop.f32.mrf.mxu0
    %v709 = vadd.f32 %v395, %v708
    %v710 = vpop.f32.mrf.mxu0
    %711 = vmatprep.mubr.f32.mxu0 0.0
    %712 = vmatmul.mubr.f32.gmra.mxu0 %v483
    %v713 = vpop.f32.mrf.mxu0
    %v714 = vadd.f32 %v401, %v713
    %v715 = vpop.f32.mrf.mxu0
    %716 = vmatprep.mubr.f32.mxu0 0.0
    %717 = vmatmul.mubr.f32.gmra.mxu0 %v484
    %v718 = vpop.f32.mrf.mxu0
    %v719 = vadd.f32 %v407, %v718
    %v720 = vpop.f32.mrf.mxu0
    %721 = vmatprep.mubr.f32.mxu0 0.0
    %722 = vmatmul.mubr.f32.gmra.mxu0 %v485
    %v723 = vpop.f32.mrf.mxu0
    %v724 = vadd.f32 %v413, %v723
    %v725 = vpop.f32.mrf.mxu0
    %726 = vdwg.mxu0
    %v727 = vld [vmem:[%s4] sm:$0x1]
    %v729 = vlaneseq
    %v730 = vshrl.u32 %v729, 7
    %v731 = vsub.s32 0, %v730
    %v732 = vrot.slane %v727, %v731
    %v734 = vadd.f32 %v569, %v732
    %v735 = vadd.f32 %v574, %v732
    %v736 = vadd.f32 %v579, %v732
    %v737 = vadd.f32 %v584, %v732
    %v738 = vadd.f32 %v589, %v732
    %v739 = vadd.f32 %v594, %v732
    %v740 = vadd.f32 %v599, %v732
    %v741 = vadd.f32 %v604, %v732
    %v742 = vadd.f32 %v609, %v732
    %v743 = vadd.f32 %v614, %v732
    %v744 = vadd.f32 %v619, %v732
    %v745 = vadd.f32 %v624, %v732
    %v746 = vadd.f32 %v629, %v732
    %v747 = vadd.f32 %v634, %v732
    %v748 = vadd.f32 %v639, %v732
    %v749 = vadd.f32 %v644, %v732
    %v750 = vadd.f32 %v649, %v732
    %v751 = vadd.f32 %v654, %v732
    %v752 = vadd.f32 %v659, %v732
    %v753 = vadd.f32 %v664, %v732
    %v754 = vadd.f32 %v669, %v732
    %v755 = vadd.f32 %v674, %v732
    %v756 = vadd.f32 %v679, %v732
    %v757 = vadd.f32 %v684, %v732
    %v758 = vadd.f32 %v689, %v732
    %v759 = vadd.f32 %v694, %v732
    %v760 = vadd.f32 %v699, %v732
    %v761 = vadd.f32 %v704, %v732
    %v762 = vadd.f32 %v709, %v732
    %v763 = vadd.f32 %v714, %v732
    %v764 = vadd.f32 %v719, %v732
    %v765 = vadd.f32 %v724, %v732
    %766 = vst [vmem:[#allocation2] sm:$0xff] %v734
    %767 = vst [vmem:[#allocation2 + $0x8] sm:$0xff] %v735
    %768 = vst [vmem:[#allocation2 + $0x10] sm:$0xff] %v736
    %769 = vst [vmem:[#allocation2 + $0x18] sm:$0xff] %v737
    %770 = vst [vmem:[#allocation2 + $0x20] sm:$0xff] %v738
    %771 = vst [vmem:[#allocation2 + $0x28] sm:$0xff] %v739
    %772 = vst [vmem:[#allocation2 + $0x30] sm:$0xff] %v740
    %773 = vst [vmem:[#allocation2 + $0x38] sm:$0xff] %v741
    %774 = vst [vmem:[#allocation2 + $0x40] sm:$0xff] %v742
    %775 = vst [vmem:[#allocation2 + $0x48] sm:$0xff] %v743
    %776 = vst [vmem:[#allocation2 + $0x50] sm:$0xff] %v744
    %777 = vst [vmem:[#allocation2 + $0x58] sm:$0xff] %v745
    %778 = vst [vmem:[#allocation2 + $0x60] sm:$0xff] %v746
    %779 = vst [vmem:[#allocation2 + $0x68] sm:$0xff] %v747
    %780 = vst [vmem:[#allocation2 + $0x70] sm:$0xff] %v748
    %781 = vst [vmem:[#allocation2 + $0x78] sm:$0xff] %v749
    %782 = vst [vmem:[#allocation2 + $0x80] sm:$0xff] %v750
    %783 = vst [vmem:[#allocation2 + $0x88] sm:$0xff] %v751
    %784 = vst [vmem:[#allocation2 + $0x90] sm:$0xff] %v752
    %785 = vst [vmem:[#allocation2 + $0x98] sm:$0xff] %v753
    %786 = vst [vmem:[#allocation2 + $0xa0] sm:$0xff] %v754
    %787 = vst [vmem:[#allocation2 + $0xa8] sm:$0xff] %v755
    %788 = vst [vmem:[#allocation2 + $0xb0] sm:$0xff] %v756
    %789 = vst [vmem:[#allocation2 + $0xb8] sm:$0xff] %v757
    %790 = vst [vmem:[#allocation2 + $0xc0] sm:$0xff] %v758
    %791 = vst [vmem:[#allocation2 + $0xc8] sm:$0xff] %v759
    %792 = vst [vmem:[#allocation2 + $0xd0] sm:$0xff] %v760
    %793 = vst [vmem:[#allocation2 + $0xd8] sm:$0xff] %v761
    %794 = vst [vmem:[#allocation2 + $0xe0] sm:$0xff] %v762
    %795 = vst [vmem:[#allocation2 + $0xe8] sm:$0xff] %v763
    %796 = vst [vmem:[#allocation2 + $0xf0] sm:$0xff] %v764
    %797 = vst [vmem:[#allocation2 + $0xf8] sm:$0xff] %v765
    // Predicated region
    $region22: #{tpu_custom_call.1} parent=1 // pred_check
      _
    $region23: #{tpu_custom_call.1} parent=1 // pred_check_branch
      %799 = sbr.rel (0) target = $region25
    $region24: #{tpu_custom_call.1} parent=1 // pred_region
      %s801 = ssub.s32 4096, 4096
      %802 = vsyncadd [#allocation3], %s801
      %s803 = sshll.u32 [#allocation2], 4
      %s804 = int_to_ptr.vmem [resolvable:$true] %s803
      %809 = dma.vmem_to_hbm [thread:$0]  %s804, 4096, %s5, [#allocation3], 128, 128, 8
    $region25: #{tpu_custom_call.1} parent=1 // pred_fallthru
      _
    // Predicated region
    $region26: #{tpu_custom_call.1} parent=1 // pred_check
      _
    $region27: #{tpu_custom_call.1} parent=1 // pred_check_branch
      %811 = sbr.rel (0) target = $region29
    $region28: #{tpu_custom_call.1} parent=1 // pred_region
      %812 = dma.done [#allocation3], 4096
    $region29: #{tpu_custom_call.1} parent=1 // pred_fallthru
      _
    %813 = vsyncpa [#allocation3], 1

// kernel: tpu_custom_call.1
$region0: #{tpu_custom_call.1}
  #allocation0 [shape = 'u32[]', space=smem, size = 0x4, offset = 0x4, fixed_abs, tag = 'smem constant byte address 0x4 - core index']
  #allocation1 [shape = 'u32[144,128]{1,0:T(1,128)}', space=vmem, size = 0x12000, scoped, tag = 'internal scratch']
  %s0 = inlined_call_operand.vmem [shape: f32[256,32], index: 0, kind: input, shape index: {}]
  %s1 = inlined_call_operand.vmem [shape: f32[32,256], index: 1, kind: input, shape index: {}]
  %s2 = inlined_call_operand.vmem [shape: f32[1,128], index: 2, kind: input, shape index: {}]
  %s3 = inlined_call_operand.vmem [shape: f32[128,128], index: 3, kind: input, shape index: {}]
  %s4 = inlined_call_operand.vmem [shape: f32[1,128], index: 4, kind: input, shape index: {}]
  %s5 = inlined_call_operand.hbm [shape: f32[256,128], index: 5, kind: output, shape index: {}]
  %s6 = sld [smem:[#allocation0]]
  $region30: #{tpu_custom_call.1} parent=0
    _
  %s8 = ssub.s32 1, %s6
  %s9 = scalar_select 0, %s8, %s6
  $region1: #{tpu_custom_call.1} parent=0
    #allocation2 [shape = 'u8[131072]{0}', space=vmem, size = 0x20000, scoped, tag = 'output window, operand 0, single buffered']
    #allocation3 [shape = 's32[1]{0}', space=sflag, size = 0x4, scoped, tag = 'scoped memory for tpu_custom_call.1']
    %10 = vsyncpa [#allocation3], 0
    // Predicated region
    $region2: #{tpu_custom_call.1} parent=1 // pred_check
      _
    $region3: #{tpu_custom_call.1} parent=1 // pred_check_branch
      %12 = sbr.rel (0) target = $region5
    $region4: #{tpu_custom_call.1} parent=1 // pred_region
      _
    $region5: #{tpu_custom_call.1} parent=1 // pred_fallthru
      _
    // Predicated region
    $region6: #{tpu_custom_call.1} parent=1 // pred_check
      _
    $region7: #{tpu_custom_call.1} parent=1 // pred_check_branch
      %14 = sbr.rel (0) target = $region9
    $region8: #{tpu_custom_call.1} parent=1 // pred_region
      _
    $region9: #{tpu_custom_call.1} parent=1 // pred_fallthru
      _
    // Predicated region
    $region10: #{tpu_custom_call.1} parent=1 // pred_check
      _
    $region11: #{tpu_custom_call.1} parent=1 // pred_check_branch
      %16 = sbr.rel (0) target = $region13
    $region12: #{tpu_custom_call.1} parent=1 // pred_region
      _
    $region13: #{tpu_custom_call.1} parent=1 // pred_fallthru
      _
    // Predicated region
    $region14: #{tpu_custom_call.1} parent=1 // pred_check
      _
    $region15: #{tpu_custom_call.1} parent=1 // pred_check_branch
      %18 = sbr.rel (0) target = $region17
    $region16: #{tpu_custom_call.1} parent=1 // pred_region
      _
    $region17: #{tpu_custom_call.1} parent=1 // pred_fallthru
      _
    // Predicated region
    $region18: #{tpu_custom_call.1} parent=1 // pred_check
      _
    $region19: #{tpu_custom_call.1} parent=1 // pred_check_branch
      %20 = sbr.rel (0) target = $region21
    $region20: #{tpu_custom_call.1} parent=1 // pred_region
      _
    $region21: #{tpu_custom_call.1} parent=1 // pred_fallthru
      _
    %v21 = vld [vmem:[%s0] sm:$0xff]
    %v22 = vld [vmem:[%s0 + $0x8] sm:$0xff]
    %v23 = vld [vmem:[%s0 + $0x10] sm:$0xff]
    %v24 = vld [vmem:[%s0 + $0x18] sm:$0xff]
    %v25 = vld [vmem:[%s0 + $0x20] sm:$0xff]
    %v26 = vld [vmem:[%s0 + $0x28] sm:$0xff]
    %v27 = vld [vmem:[%s0 + $0x30] sm:$0xff]
    %v28 = vld [vmem:[%s0 + $0x38] sm:$0xff]
    %v29 = vld [vmem:[%s0 + $0x40] sm:$0xff]
    %v30 = vld [vmem:[%s0 + $0x48] sm:$0xff]
    %v31 = vld [vmem:[%s0 + $0x50] sm:$0xff]
    %v32 = vld [vmem:[%s0 + $0x58] sm:$0xff]
    %v33 = vld [vmem:[%s0 + $0x60] sm:$0xff]
    %v34 = vld [vmem:[%s0 + $0x68] sm:$0xff]
    %v35 = vld [vmem:[%s0 + $0x70] sm:$0xff]
    %v36 = vld [vmem:[%s0 + $0x78] sm:$0xff]
    %v37 = vld [vmem:[%s0 + $0x80] sm:$0xff]
    %v38 = vld [vmem:[%s0 + $0x88] sm:$0xff]
    %v39 = vld [vmem:[%s0 + $0x90] sm:$0xff]
    %v40 = vld [vmem:[%s0 + $0x98] sm:$0xff]
    %v41 = vld [vmem:[%s0 + $0xa0] sm:$0xff]
    %v42 = vld [vmem:[%s0 + $0xa8] sm:$0xff]
    %v43 = vld [vmem:[%s0 + $0xb0] sm:$0xff]
    %v44 = vld [vmem:[%s0 + $0xb8] sm:$0xff]
    %v45 = vld [vmem:[%s0 + $0xc0] sm:$0xff]
    %v46 = vld [vmem:[%s0 + $0xc8] sm:$0xff]
    %v47 = vld [vmem:[%s0 + $0xd0] sm:$0xff]
    %v48 = vld [vmem:[%s0 + $0xd8] sm:$0xff]
    %v49 = vld [vmem:[%s0 + $0xe0] sm:$0xff]
    %v50 = vld [vmem:[%s0 + $0xe8] sm:$0xff]
    %v51 = vld [vmem:[%s0 + $0xf0] sm:$0xff]
    %v52 = vld [vmem:[%s0 + $0xf8] sm:$0xff]
    %v53 = vld [vmem:[%s1] sm:$0xff]
    %v54 = vld [vmem:[%s1 + $0x8] sm:$0xff]
    %v55 = vld [vmem:[%s1 + $0x10] sm:$0xff]
    %v56 = vld [vmem:[%s1 + $0x18] sm:$0xff]
    %v57 = vld [vmem:[%s1 + $0x20] sm:$0xff]
    %v58 = vld [vmem:[%s1 + $0x28] sm:$0xff]
    %v59 = vld [vmem:[%s1 + $0x30] sm:$0xff]
    %v60 = vld [vmem:[%s1 + $0x38] sm:$0xff]
    %vm61 = vcmask 261120
    %v63 = vsel %vm61, %v21, 0
    %v66 = vsel %vm61, %v22, 0
    %v69 = vsel %vm61, %v23, 0
    %v72 = vsel %vm61, %v24, 0
    %v75 = vsel %vm61, %v25, 0
    %v78 = vsel %vm61, %v26, 0
    %v81 = vsel %vm61, %v27, 0
    %v84 = vsel %vm61, %v28, 0
    %v87 = vsel %vm61, %v29, 0
    %v90 = vsel %vm61, %v30, 0
    %v93 = vsel %vm61, %v31, 0
    %v96 = vsel %vm61, %v32, 0
    %v99 = vsel %vm61, %v33, 0
    %v102 = vsel %vm61, %v34, 0
    %v105 = vsel %vm61, %v35, 0
    %v108 = vsel %vm61, %v36, 0
    %v111 = vsel %vm61, %v37, 0
    %v114 = vsel %vm61, %v38, 0
    %v117 = vsel %vm61, %v39, 0
    %v120 = vsel %vm61, %v40, 0
    %v123 = vsel %vm61, %v41, 0
    %v126 = vsel %vm61, %v42, 0
    %v129 = vsel %vm61, %v43, 0
    %v132 = vsel %vm61, %v44, 0
    %v135 = vsel %vm61, %v45, 0
    %v138 = vsel %vm61, %v46, 0
    %v141 = vsel %vm61, %v47, 0
    %v144 = vsel %vm61, %v48, 0
    %v147 = vsel %vm61, %v49, 0
    %v150 = vsel %vm61, %v50, 0
    %v153 = vsel %vm61, %v51, 0
    %v156 = vsel %vm61, %v52, 0
    %158 = vmatprep.subr.mxu0 0.0
    %159 = vmatpush1.msra.mxu0 0.0
    %160 = vmatprep.subr.mxu0 0.0
    %161 = vmatpush1.msra.mxu0 0.0
    %162 = vmatprep.subr.mxu0 0.0
    %163 = vmatpush1.msra.mxu0 0.0
    %164 = vmatprep.subr.mxu0 0.0
    %165 = vmatpush1.msra.mxu0 0.0
    %166 = vmatprep.subr.mxu0 0.0
    %167 = vmatpush1.msra.mxu0 0.0
    %168 = vmatprep.subr.mxu0 0.0
    %169 = vmatpush1.msra.mxu0 0.0
    %170 = vmatprep.subr.mxu0 0.0
    %171 = vmatpush1.msra.mxu0 0.0
    %172 = vmatprep.subr.mxu0 0.0
    %173 = vmatpush1.msra.mxu0 0.0
    %174 = vmatprep.subr.mxu0 0.0
    %175 = vmatpush1.msra.mxu0 0.0
    %176 = vmatprep.subr.mxu0 0.0
    %177 = vmatpush1.msra.mxu0 0.0
    %178 = vmatprep.subr.mxu0 0.0
    %179 = vmatpush1.msra.mxu0 0.0
    %180 = vmatprep.subr.mxu0 0.0
    %181 = vmatpush1.msra.mxu0 0.0
    %182 = vmatprep.subr.mxu0 %v60
    %183 = vmatpush1.msra.mxu0 %v59
    %184 = vmatprep.subr.mxu0 %v58
    %185 = vmatpush1.msra.mxu0 %v57
    %186 = vmatprep.subr.mxu0 %v56
    %187 = vmatpush1.msra.mxu0 %v55
    %188 = vmatprep.subr.mxu0 %v54
    %189 = vmatpush1.msra.mxu0 %v53
    %190 = vmatprep.subr.mxu0 0.0
    %191 = vmatpush2.msra.mxu0 0.0
    %192 = vmatprep.subr.mxu0 0.0
    %193 = vmatpush2.msra.mxu0 0.0
    %194 = vmatprep.subr.mxu0 0.0
    %195 = vmatpush2.msra.mxu0 0.0
    %196 = vmatprep.subr.mxu0 0.0
    %197 = vmatpush2.msra.mxu0 0.0
    %198 = vmatprep.subr.mxu0 0.0
    %199 = vmatpush2.msra.mxu0 0.0
    %200 = vmatprep.subr.mxu0 0.0
    %201 = vmatpush2.msra.mxu0 0.0
    %202 = vmatprep.subr.mxu0 0.0
    %203 = vmatpush2.msra.mxu0 0.0
    %204 = vmatprep.subr.mxu0 0.0
    %205 = vmatpush2.msra.mxu0 0.0
    %206 = vmatprep.subr.mxu0 0.0
    %207 = vmatpush2.msra.mxu0 0.0
    %208 = vmatprep.subr.mxu0 0.0
    %209 = vmatpush2.msra.mxu0 0.0
    %210 = vmatprep.subr.mxu0 0.0
    %211 = vmatpush2.msra.mxu0 0.0
    %212 = vmatprep.subr.mxu0 0.0
    %213 = vmatpush2.msra.mxu0 0.0
    %214 = vmatprep.subr.mxu0 0.0
    %215 = vmatpush2.msra.mxu0 0.0
    %216 = vmatprep.subr.mxu0 0.0
    %217 = vmatpush2.msra.mxu0 0.0
    %218 = vmatprep.subr.mxu0 0.0
    %219 = vmatpush2.msra.mxu0 0.0
    %220 = vmatprep.subr.mxu0 0.0
    %221 = vmatpush2.msra.mxu0 0.0
    %222 = vmatprep.mubr.f32.mxu0 0.0
    %223 = vmatmul.mubr.f32.gmra.mxu0 %v63
    %v224 = vpop.f32.mrf.mxu0
    %v225 = vadd.f32 0.0, %v224
    %v226 = vpop.f32.mrf.mxu0
    %v227 = vadd.f32 0.0, %v226
    %228 = vmatprep.mubr.f32.mxu0 0.0
    %229 = vmatmul.mubr.f32.gmra.mxu0 %v66
    %v230 = vpop.f32.mrf.mxu0
    %v231 = vadd.f32 0.0, %v230
    %v232 = vpop.f32.mrf.mxu0
    %v233 = vadd.f32 0.0, %v232
    %234 = vmatprep.mubr.f32.mxu0 0.0
    %235 = vmatmul.mubr.f32.gmra.mxu0 %v69
    %v236 = vpop.f32.mrf.mxu0
    %v237 = vadd.f32 0.0, %v236
    %v238 = vpop.f32.mrf.mxu0
    %v239 = vadd.f32 0.0, %v238
    %240 = vmatprep.mubr.f32.mxu0 0.0
    %241 = vmatmul.mubr.f32.gmra.mxu0 %v72
    %v242 = vpop.f32.mrf.mxu0
    %v243 = vadd.f32 0.0, %v242
    %v244 = vpop.f32.mrf.mxu0
    %v245 = vadd.f32 0.0, %v244
    %246 = vmatprep.mubr.f32.mxu0 0.0
    %247 = vmatmul.mubr.f32.gmra.mxu0 %v75
    %v248 = vpop.f32.mrf.mxu0
    %v249 = vadd.f32 0.0, %v248
    %v250 = vpop.f32.mrf.mxu0
    %v251 = vadd.f32 0.0, %v250
    %252 = vmatprep.mubr.f32.mxu0 0.0
    %253 = vmatmul.mubr.f32.gmra.mxu0 %v78
    %v254 = vpop.f32.mrf.mxu0
    %v255 = vadd.f32 0.0, %v254
    %v256 = vpop.f32.mrf.mxu0
    %v257 = vadd.f32 0.0, %v256
    %258 = vmatprep.mubr.f32.mxu0 0.0
    %259 = vmatmul.mubr.f32.gmra.mxu0 %v81
    %v260 = vpop.f32.mrf.mxu0
    %v261 = vadd.f32 0.0, %v260
    %v262 = vpop.f32.mrf.mxu0
    %v263 = vadd.f32 0.0, %v262
    %264 = vmatprep.mubr.f32.mxu0 0.0
    %265 = vmatmul.mubr.f32.gmra.mxu0 %v84
    %v266 = vpop.f32.mrf.mxu0
    %v267 = vadd.f32 0.0, %v266
    %v268 = vpop.f32.mrf.mxu0
    %v269 = vadd.f32 0.0, %v268
    %270 = vmatprep.mubr.f32.mxu0 0.0
    %271 = vmatmul.mubr.f32.gmra.mxu0 %v87
    %v272 = vpop.f32.mrf.mxu0
    %v273 = vadd.f32 0.0, %v272
    %v274 = vpop.f32.mrf.mxu0
    %v275 = vadd.f32 0.0, %v274
    %276 = vmatprep.mubr.f32.mxu0 0.0
    %277 = vmatmul.mubr.f32.gmra.mxu0 %v90
    %v278 = vpop.f32.mrf.mxu0
    %v279 = vadd.f32 0.0, %v278
    %v280 = vpop.f32.mrf.mxu0
    %v281 = vadd.f32 0.0, %v280
    %282 = vmatprep.mubr.f32.mxu0 0.0
    %283 = vmatmul.mubr.f32.gmra.mxu0 %v93
    %v284 = vpop.f32.mrf.mxu0
    %v285 = vadd.f32 0.0, %v284
    %v286 = vpop.f32.mrf.mxu0
    %v287 = vadd.f32 0.0, %v286
    %288 = vmatprep.mubr.f32.mxu0 0.0
    %289 = vmatmul.mubr.f32.gmra.mxu0 %v96
    %v290 = vpop.f32.mrf.mxu0
    %v291 = vadd.f32 0.0, %v290
    %v292 = vpop.f32.mrf.mxu0
    %v293 = vadd.f32 0.0, %v292
    %294 = vmatprep.mubr.f32.mxu0 0.0
    %295 = vmatmul.mubr.f32.gmra.mxu0 %v99
    %v296 = vpop.f32.mrf.mxu0
    %v297 = vadd.f32 0.0, %v296
    %v298 = vpop.f32.mrf.mxu0
    %v299 = vadd.f32 0.0, %v298
    %300 = vmatprep.mubr.f32.mxu0 0.0
    %301 = vmatmul.mubr.f32.gmra.mxu0 %v102
    %v302 = vpop.f32.mrf.mxu0
    %v303 = vadd.f32 0.0, %v302
    %v304 = vpop.f32.mrf.mxu0
    %v305 = vadd.f32 0.0, %v304
    %306 = vmatprep.mubr.f32.mxu0 0.0
    %307 = vmatmul.mubr.f32.gmra.mxu0 %v105
    %v308 = vpop.f32.mrf.mxu0
    %v309 = vadd.f32 0.0, %v308
    %v310 = vpop.f32.mrf.mxu0
    %v311 = vadd.f32 0.0, %v310
    %312 = vmatprep.mubr.f32.mxu0 0.0
    %313 = vmatmul.mubr.f32.gmra.mxu0 %v108
    %v314 = vpop.f32.mrf.mxu0
    %v315 = vadd.f32 0.0, %v314
    %v316 = vpop.f32.mrf.mxu0
    %v317 = vadd.f32 0.0, %v316
    %318 = vmatprep.mubr.f32.mxu0 0.0
    %319 = vmatmul.mubr.f32.gmra.mxu0 %v111
    %v320 = vpop.f32.mrf.mxu0
    %v321 = vadd.f32 0.0, %v320
    %v322 = vpop.f32.mrf.mxu0
    %v323 = vadd.f32 0.0, %v322
    %324 = vmatprep.mubr.f32.mxu0 0.0
    %325 = vmatmul.mubr.f32.gmra.mxu0 %v114
    %v326 = vpop.f32.mrf.mxu0
    %v327 = vadd.f32 0.0, %v326
    %v328 = vpop.f32.mrf.mxu0
    %v329 = vadd.f32 0.0, %v328
    %330 = vmatprep.mubr.f32.mxu0 0.0
    %331 = vmatmul.mubr.f32.gmra.mxu0 %v117
    %v332 = vpop.f32.mrf.mxu0
    %v333 = vadd.f32 0.0, %v332
    %v334 = vpop.f32.mrf.mxu0
    %v335 = vadd.f32 0.0, %v334
    %336 = vmatprep.mubr.f32.mxu0 0.0
    %337 = vmatmul.mubr.f32.gmra.mxu0 %v120
    %v338 = vpop.f32.mrf.mxu0
    %v339 = vadd.f32 0.0, %v338
    %v340 = vpop.f32.mrf.mxu0
    %v341 = vadd.f32 0.0, %v340
    %342 = vmatprep.mubr.f32.mxu0 0.0
    %343 = vmatmul.mubr.f32.gmra.mxu0 %v123
    %v344 = vpop.f32.mrf.mxu0
    %v345 = vadd.f32 0.0, %v344
    %v346 = vpop.f32.mrf.mxu0
    %v347 = vadd.f32 0.0, %v346
    %348 = vmatprep.mubr.f32.mxu0 0.0
    %349 = vmatmul.mubr.f32.gmra.mxu0 %v126
    %v350 = vpop.f32.mrf.mxu0
    %v351 = vadd.f32 0.0, %v350
    %v352 = vpop.f32.mrf.mxu0
    %v353 = vadd.f32 0.0, %v352
    %354 = vmatprep.mubr.f32.mxu0 0.0
    %355 = vmatmul.mubr.f32.gmra.mxu0 %v129
    %v356 = vpop.f32.mrf.mxu0
    %v357 = vadd.f32 0.0, %v356
    %v358 = vpop.f32.mrf.mxu0
    %v359 = vadd.f32 0.0, %v358
    %360 = vmatprep.mubr.f32.mxu0 0.0
    %361 = vmatmul.mubr.f32.gmra.mxu0 %v132
    %v362 = vpop.f32.mrf.mxu0
    %v363 = vadd.f32 0.0, %v362
    %v364 = vpop.f32.mrf.mxu0
    %v365 = vadd.f32 0.0, %v364
    %366 = vmatprep.mubr.f32.mxu0 0.0
    %367 = vmatmul.mubr.f32.gmra.mxu0 %v135
    %v368 = vpop.f32.mrf.mxu0
    %v369 = vadd.f32 0.0, %v368
    %v370 = vpop.f32.mrf.mxu0
    %v371 = vadd.f32 0.0, %v370
    %372 = vmatprep.mubr.f32.mxu0 0.0
    %373 = vmatmul.mubr.f32.gmra.mxu0 %v138
    %v374 = vpop.f32.mrf.mxu0
    %v375 = vadd.f32 0.0, %v374
    %v376 = vpop.f32.mrf.mxu0
    %v377 = vadd.f32 0.0, %v376
    %378 = vmatprep.mubr.f32.mxu0 0.0
    %379 = vmatmul.mubr.f32.gmra.mxu0 %v141
    %v380 = vpop.f32.mrf.mxu0
    %v381 = vadd.f32 0.0, %v380
    %v382 = vpop.f32.mrf.mxu0
    %v383 = vadd.f32 0.0, %v382
    %384 = vmatprep.mubr.f32.mxu0 0.0
    %385 = vmatmul.mubr.f32.gmra.mxu0 %v144
    %v386 = vpop.f32.mrf.mxu0
    %v387 = vadd.f32 0.0, %v386
    %v388 = vpop.f32.mrf.mxu0
    %v389 = vadd.f32 0.0, %v388
    %390 = vmatprep.mubr.f32.mxu0 0.0
    %391 = vmatmul.mubr.f32.gmra.mxu0 %v147
    %v392 = vpop.f32.mrf.mxu0
    %v393 = vadd.f32 0.0, %v392
    %v394 = vpop.f32.mrf.mxu0
    %v395 = vadd.f32 0.0, %v394
    %396 = vmatprep.mubr.f32.mxu0 0.0
    %397 = vmatmul.mubr.f32.gmra.mxu0 %v150
    %v398 = vpop.f32.mrf.mxu0
    %v399 = vadd.f32 0.0, %v398
    %v400 = vpop.f32.mrf.mxu0
    %v401 = vadd.f32 0.0, %v400
    %402 = vmatprep.mubr.f32.mxu0 0.0
    %403 = vmatmul.mubr.f32.gmra.mxu0 %v153
    %v404 = vpop.f32.mrf.mxu0
    %v405 = vadd.f32 0.0, %v404
    %v406 = vpop.f32.mrf.mxu0
    %v407 = vadd.f32 0.0, %v406
    %408 = vmatprep.mubr.f32.mxu0 0.0
    %409 = vmatmul.mubr.f32.gmra.mxu0 %v156
    %v410 = vpop.f32.mrf.mxu0
    %v411 = vadd.f32 0.0, %v410
    %v412 = vpop.f32.mrf.mxu0
    %v413 = vadd.f32 0.0, %v412
    %414 = vdwg.mxu0
    %v415 = vld [vmem:[%s2] sm:$0x1]
    %v417 = vlaneseq
    %v418 = vshrl.u32 %v417, 7
    %v419 = vsub.s32 0, %v418
    %v420 = vrot.slane %v415, %v419
    %v422 = vadd.f32 %v225, %v420
    %v423 = vadd.f32 %v231, %v420
    %v424 = vadd.f32 %v237, %v420
    %v425 = vadd.f32 %v243, %v420
    %v426 = vadd.f32 %v249, %v420
    %v427 = vadd.f32 %v255, %v420
    %v428 = vadd.f32 %v261, %v420
    %v429 = vadd.f32 %v267, %v420
    %v430 = vadd.f32 %v273, %v420
    %v431 = vadd.f32 %v279, %v420
    %v432 = vadd.f32 %v285, %v420
    %v433 = vadd.f32 %v291, %v420
    %v434 = vadd.f32 %v297, %v420
    %v435 = vadd.f32 %v303, %v420
    %v436 = vadd.f32 %v309, %v420
    %v437 = vadd.f32 %v315, %v420
    %v438 = vadd.f32 %v321, %v420
    %v439 = vadd.f32 %v327, %v420
    %v440 = vadd.f32 %v333, %v420
    %v441 = vadd.f32 %v339, %v420
    %v442 = vadd.f32 %v345, %v420
    %v443 = vadd.f32 %v351, %v420
    %v444 = vadd.f32 %v357, %v420
    %v445 = vadd.f32 %v363, %v420
    %v446 = vadd.f32 %v369, %v420
    %v447 = vadd.f32 %v375, %v420
    %v448 = vadd.f32 %v381, %v420
    %v449 = vadd.f32 %v387, %v420
    %v450 = vadd.f32 %v393, %v420
    %v451 = vadd.f32 %v399, %v420
    %v452 = vadd.f32 %v405, %v420
    %v453 = vadd.f32 %v411, %v420
    %v454 = vmax.f32 %v422, 0.0
    %v455 = vmax.f32 %v423, 0.0
    %v456 = vmax.f32 %v424, 0.0
    %v457 = vmax.f32 %v425, 0.0
    %v458 = vmax.f32 %v426, 0.0
    %v459 = vmax.f32 %v427, 0.0
    %v460 = vmax.f32 %v428, 0.0
    %v461 = vmax.f32 %v429, 0.0
    %v462 = vmax.f32 %v430, 0.0
    %v463 = vmax.f32 %v431, 0.0
    %v464 = vmax.f32 %v432, 0.0
    %v465 = vmax.f32 %v433, 0.0
    %v466 = vmax.f32 %v434, 0.0
    %v467 = vmax.f32 %v435, 0.0
    %v468 = vmax.f32 %v436, 0.0
    %v469 = vmax.f32 %v437, 0.0
    %v470 = vmax.f32 %v438, 0.0
    %v471 = vmax.f32 %v439, 0.0
    %v472 = vmax.f32 %v440, 0.0
    %v473 = vmax.f32 %v441, 0.0
    %v474 = vmax.f32 %v442, 0.0
    %v475 = vmax.f32 %v443, 0.0
    %v476 = vmax.f32 %v444, 0.0
    %v477 = vmax.f32 %v445, 0.0
    %v478 = vmax.f32 %v446, 0.0
    %v479 = vmax.f32 %v447, 0.0
    %v480 = vmax.f32 %v448, 0.0
    %v481 = vmax.f32 %v449, 0.0
    %v482 = vmax.f32 %v450, 0.0
    %v483 = vmax.f32 %v451, 0.0
    %v484 = vmax.f32 %v452, 0.0
    %v485 = vmax.f32 %v453, 0.0
    %v486 = vld [vmem:[%s3] sm:$0xff]
    %v487 = vld [vmem:[%s3 + $0x8] sm:$0xff]
    %v488 = vld [vmem:[%s3 + $0x10] sm:$0xff]
    %v489 = vld [vmem:[%s3 + $0x18] sm:$0xff]
    %v490 = vld [vmem:[%s3 + $0x20] sm:$0xff]
    %v491 = vld [vmem:[%s3 + $0x28] sm:$0xff]
    %v492 = vld [vmem:[%s3 + $0x30] sm:$0xff]
    %v493 = vld [vmem:[%s3 + $0x38] sm:$0xff]
    %v494 = vld [vmem:[%s3 + $0x40] sm:$0xff]
    %v495 = vld [vmem:[%s3 + $0x48] sm:$0xff]
    %v496 = vld [vmem:[%s3 + $0x50] sm:$0xff]
    %v497 = vld [vmem:[%s3 + $0x58] sm:$0xff]
    %v498 = vld [vmem:[%s3 + $0x60] sm:$0xff]
    %v499 = vld [vmem:[%s3 + $0x68] sm:$0xff]
    %v500 = vld [vmem:[%s3 + $0x70] sm:$0xff]
    %v501 = vld [vmem:[%s3 + $0x78] sm:$0xff]
    %502 = vmatprep.subr.mxu0 0.0
    %503 = vmatpush1.msra.mxu0 %v501
    %504 = vmatprep.subr.mxu0 0.0
    %505 = vmatpush1.msra.mxu0 %v500
    %506 = vmatprep.subr.mxu0 0.0
    %507 = vmatpush1.msra.mxu0 %v499
    %508 = vmatprep.subr.mxu0 0.0
    %509 = vmatpush1.msra.mxu0 %v498
    %510 = vmatprep.subr.mxu0 0.0
    %511 = vmatpush1.msra.mxu0 %v497
    %512 = vmatprep.subr.mxu0 0.0
    %513 = vmatpush1.msra.mxu0 %v496
    %514 = vmatprep.subr.mxu0 0.0
    %515 = vmatpush1.msra.mxu0 %v495
    %516 = vmatprep.subr.mxu0 0.0
    %517 = vmatpush1.msra.mxu0 %v494
    %518 = vmatprep.subr.mxu0 0.0
    %519 = vmatpush1.msra.mxu0 %v493
    %520 = vmatprep.subr.mxu0 0.0
    %521 = vmatpush1.msra.mxu0 %v492
    %522 = vmatprep.subr.mxu0 0.0
    %523 = vmatpush1.msra.mxu0 %v491
    %524 = vmatprep.subr.mxu0 0.0
    %525 = vmatpush1.msra.mxu0 %v490
    %526 = vmatprep.subr.mxu0 0.0
    %527 = vmatpush1.msra.mxu0 %v489
    %528 = vmatprep.subr.mxu0 0.0
    %529 = vmatpush1.msra.mxu0 %v488
    %530 = vmatprep.subr.mxu0 0.0
    %531 = vmatpush1.msra.mxu0 %v487
    %532 = vmatprep.subr.mxu0 0.0
    %533 = vmatpush1.msra.mxu0 %v486
    %534 = vmatprep.subr.mxu0 0.0
    %535 = vmatpush2.msra.mxu0 0.0
    %536 = vmatprep.subr.mxu0 0.0
    %537 = vmatpush2.msra.mxu0 0.0
    %538 = vmatprep.subr.mxu0 0.0
    %539 = vmatpush2.msra.mxu0 0.0
    %540 = vmatprep.subr.mxu0 0.0
    %541 = vmatpush2.msra.mxu0 0.0
    %542 = vmatprep.subr.mxu0 0.0
    %543 = vmatpush2.msra.mxu0 0.0
    %544 = vmatprep.subr.mxu0 0.0
    %545 = vmatpush2.msra.mxu0 0.0
    %546 = vmatprep.subr.mxu0 0.0
    %547 = vmatpush2.msra.mxu0 0.0
    %548 = vmatprep.subr.mxu0 0.0
    %549 = vmatpush2.msra.mxu0 0.0
    %550 = vmatprep.subr.mxu0 0.0
    %551 = vmatpush2.msra.mxu0 0.0
    %552 = vmatprep.subr.mxu0 0.0
    %553 = vmatpush2.msra.mxu0 0.0
    %554 = vmatprep.subr.mxu0 0.0
    %555 = vmatpush2.msra.mxu0 0.0
    %556 = vmatprep.subr.mxu0 0.0
    %557 = vmatpush2.msra.mxu0 0.0
    %558 = vmatprep.subr.mxu0 0.0
    %559 = vmatpush2.msra.mxu0 0.0
    %560 = vmatprep.subr.mxu0 0.0
    %561 = vmatpush2.msra.mxu0 0.0
    %562 = vmatprep.subr.mxu0 0.0
    %563 = vmatpush2.msra.mxu0 0.0
    %564 = vmatprep.subr.mxu0 0.0
    %565 = vmatpush2.msra.mxu0 0.0
    %566 = vmatprep.mubr.f32.mxu0 0.0
    %567 = vmatmul.mubr.f32.gmra.mxu0 %v454
    %v568 = vpop.f32.mrf.mxu0
    %v569 = vadd.f32 %v227, %v568
    %v570 = vpop.f32.mrf.mxu0
    %571 = vmatprep.mubr.f32.mxu0 0.0
    %572 = vmatmul.mubr.f32.gmra.mxu0 %v455
    %v573 = vpop.f32.mrf.mxu0
    %v574 = vadd.f32 %v233, %v573
    %v575 = vpop.f32.mrf.mxu0
    %576 = vmatprep.mubr.f32.mxu0 0.0
    %577 = vmatmul.mubr.f32.gmra.mxu0 %v456
    %v578 = vpop.f32.mrf.mxu0
    %v579 = vadd.f32 %v239, %v578
    %v580 = vpop.f32.mrf.mxu0
    %581 = vmatprep.mubr.f32.mxu0 0.0
    %582 = vmatmul.mubr.f32.gmra.mxu0 %v457
    %v583 = vpop.f32.mrf.mxu0
    %v584 = vadd.f32 %v245, %v583
    %v585 = vpop.f32.mrf.mxu0
    %586 = vmatprep.mubr.f32.mxu0 0.0
    %587 = vmatmul.mubr.f32.gmra.mxu0 %v458
    %v588 = vpop.f32.mrf.mxu0
    %v589 = vadd.f32 %v251, %v588
    %v590 = vpop.f32.mrf.mxu0
    %591 = vmatprep.mubr.f32.mxu0 0.0
    %592 = vmatmul.mubr.f32.gmra.mxu0 %v459
    %v593 = vpop.f32.mrf.mxu0
    %v594 = vadd.f32 %v257, %v593
    %v595 = vpop.f32.mrf.mxu0
    %596 = vmatprep.mubr.f32.mxu0 0.0
    %597 = vmatmul.mubr.f32.gmra.mxu0 %v460
    %v598 = vpop.f32.mrf.mxu0
    %v599 = vadd.f32 %v263, %v598
    %v600 = vpop.f32.mrf.mxu0
    %601 = vmatprep.mubr.f32.mxu0 0.0
    %602 = vmatmul.mubr.f32.gmra.mxu0 %v461
    %v603 = vpop.f32.mrf.mxu0
    %v604 = vadd.f32 %v269, %v603
    %v605 = vpop.f32.mrf.mxu0
    %606 = vmatprep.mubr.f32.mxu0 0.0
    %607 = vmatmul.mubr.f32.gmra.mxu0 %v462
    %v608 = vpop.f32.mrf.mxu0
    %v609 = vadd.f32 %v275, %v608
    %v610 = vpop.f32.mrf.mxu0
    %611 = vmatprep.mubr.f32.mxu0 0.0
    %612 = vmatmul.mubr.f32.gmra.mxu0 %v463
    %v613 = vpop.f32.mrf.mxu0
    %v614 = vadd.f32 %v281, %v613
    %v615 = vpop.f32.mrf.mxu0
    %616 = vmatprep.mubr.f32.mxu0 0.0
    %617 = vmatmul.mubr.f32.gmra.mxu0 %v464
    %v618 = vpop.f32.mrf.mxu0
    %v619 = vadd.f32 %v287, %v618
    %v620 = vpop.f32.mrf.mxu0
    %621 = vmatprep.mubr.f32.mxu0 0.0
    %622 = vmatmul.mubr.f32.gmra.mxu0 %v465
    %v623 = vpop.f32.mrf.mxu0
    %v624 = vadd.f32 %v293, %v623
    %v625 = vpop.f32.mrf.mxu0
    %626 = vmatprep.mubr.f32.mxu0 0.0
    %627 = vmatmul.mubr.f32.gmra.mxu0 %v466
    %v628 = vpop.f32.mrf.mxu0
    %v629 = vadd.f32 %v299, %v628
    %v630 = vpop.f32.mrf.mxu0
    %631 = vmatprep.mubr.f32.mxu0 0.0
    %632 = vmatmul.mubr.f32.gmra.mxu0 %v467
    %v633 = vpop.f32.mrf.mxu0
    %v634 = vadd.f32 %v305, %v633
    %v635 = vpop.f32.mrf.mxu0
    %636 = vmatprep.mubr.f32.mxu0 0.0
    %637 = vmatmul.mubr.f32.gmra.mxu0 %v468
    %v638 = vpop.f32.mrf.mxu0
    %v639 = vadd.f32 %v311, %v638
    %v640 = vpop.f32.mrf.mxu0
    %641 = vmatprep.mubr.f32.mxu0 0.0
    %642 = vmatmul.mubr.f32.gmra.mxu0 %v469
    %v643 = vpop.f32.mrf.mxu0
    %v644 = vadd.f32 %v317, %v643
    %v645 = vpop.f32.mrf.mxu0
    %646 = vmatprep.mubr.f32.mxu0 0.0
    %647 = vmatmul.mubr.f32.gmra.mxu0 %v470
    %v648 = vpop.f32.mrf.mxu0
    %v649 = vadd.f32 %v323, %v648
    %v650 = vpop.f32.mrf.mxu0
    %651 = vmatprep.mubr.f32.mxu0 0.0
    %652 = vmatmul.mubr.f32.gmra.mxu0 %v471
    %v653 = vpop.f32.mrf.mxu0
    %v654 = vadd.f32 %v329, %v653
    %v655 = vpop.f32.mrf.mxu0
    %656 = vmatprep.mubr.f32.mxu0 0.0
    %657 = vmatmul.mubr.f32.gmra.mxu0 %v472
    %v658 = vpop.f32.mrf.mxu0
    %v659 = vadd.f32 %v335, %v658
    %v660 = vpop.f32.mrf.mxu0
    %661 = vmatprep.mubr.f32.mxu0 0.0
    %662 = vmatmul.mubr.f32.gmra.mxu0 %v473
    %v663 = vpop.f32.mrf.mxu0
    %v664 = vadd.f32 %v341, %v663
    %v665 = vpop.f32.mrf.mxu0
    %666 = vmatprep.mubr.f32.mxu0 0.0
    %667 = vmatmul.mubr.f32.gmra.mxu0 %v474
    %v668 = vpop.f32.mrf.mxu0
    %v669 = vadd.f32 %v347, %v668
    %v670 = vpop.f32.mrf.mxu0
    %671 = vmatprep.mubr.f32.mxu0 0.0
    %672 = vmatmul.mubr.f32.gmra.mxu0 %v475
    %v673 = vpop.f32.mrf.mxu0
    %v674 = vadd.f32 %v353, %v673
    %v675 = vpop.f32.mrf.mxu0
    %676 = vmatprep.mubr.f32.mxu0 0.0
    %677 = vmatmul.mubr.f32.gmra.mxu0 %v476
    %v678 = vpop.f32.mrf.mxu0
    %v679 = vadd.f32 %v359, %v678
    %v680 = vpop.f32.mrf.mxu0
    %681 = vmatprep.mubr.f32.mxu0 0.0
    %682 = vmatmul.mubr.f32.gmra.mxu0 %v477
    %v683 = vpop.f32.mrf.mxu0
    %v684 = vadd.f32 %v365, %v683
    %v685 = vpop.f32.mrf.mxu0
    %686 = vmatprep.mubr.f32.mxu0 0.0
    %687 = vmatmul.mubr.f32.gmra.mxu0 %v478
    %v688 = vpop.f32.mrf.mxu0
    %v689 = vadd.f32 %v371, %v688
    %v690 = vpop.f32.mrf.mxu0
    %691 = vmatprep.mubr.f32.mxu0 0.0
    %692 = vmatmul.mubr.f32.gmra.mxu0 %v479
    %v693 = vpop.f32.mrf.mxu0
    %v694 = vadd.f32 %v377, %v693
    %v695 = vpop.f32.mrf.mxu0
    %696 = vmatprep.mubr.f32.mxu0 0.0
    %697 = vmatmul.mubr.f32.gmra.mxu0 %v480
    %v698 = vpop.f32.mrf.mxu0
    %v699 = vadd.f32 %v383, %v698
    %v700 = vpop.f32.mrf.mxu0
    %701 = vmatprep.mubr.f32.mxu0 0.0
    %702 = vmatmul.mubr.f32.gmra.mxu0 %v481
    %v703 = vpop.f32.mrf.mxu0
    %v704 = vadd.f32 %v389, %v703
    %v705 = vpop.f32.mrf.mxu0
    %706 = vmatprep.mubr.f32.mxu0 0.0
    %707 = vmatmul.mubr.f32.gmra.mxu0 %v482
    %v708 = vpop.f32.mrf.mxu0
    %v709 = vadd.f32 %v395, %v708
    %v710 = vpop.f32.mrf.mxu0
    %711 = vmatprep.mubr.f32.mxu0 0.0
    %712 = vmatmul.mubr.f32.gmra.mxu0 %v483
    %v713 = vpop.f32.mrf.mxu0
    %v714 = vadd.f32 %v401, %v713
    %v715 = vpop.f32.mrf.mxu0
    %716 = vmatprep.mubr.f32.mxu0 0.0
    %717 = vmatmul.mubr.f32.gmra.mxu0 %v484
    %v718 = vpop.f32.mrf.mxu0
    %v719 = vadd.f32 %v407, %v718
    %v720 = vpop.f32.mrf.mxu0
    %721 = vmatprep.mubr.f32.mxu0 0.0
    %722 = vmatmul.mubr.f32.gmra.mxu0 %v485
    %v723 = vpop.f32.mrf.mxu0
    %v724 = vadd.f32 %v413, %v723
    %v725 = vpop.f32.mrf.mxu0
    %726 = vdwg.mxu0
    %v727 = vld [vmem:[%s4] sm:$0x1]
    %v729 = vlaneseq
    %v730 = vshrl.u32 %v729, 7
    %v731 = vsub.s32 0, %v730
    %v732 = vrot.slane %v727, %v731
    %v734 = vadd.f32 %v569, %v732
    %v735 = vadd.f32 %v574, %v732
    %v736 = vadd.f32 %v579, %v732
    %v737 = vadd.f32 %v584, %v732
    %v738 = vadd.f32 %v589, %v732
    %v739 = vadd.f32 %v594, %v732
    %v740 = vadd.f32 %v599, %v732
    %v741 = vadd.f32 %v604, %v732
    %v742 = vadd.f32 %v609, %v732
    %v743 = vadd.f32 %v614, %v732
    %v744 = vadd.f32 %v619, %v732
    %v745 = vadd.f32 %v624, %v732
    %v746 = vadd.f32 %v629, %v732
    %v747 = vadd.f32 %v634, %v732
    %v748 = vadd.f32 %v639, %v732
    %v749 = vadd.f32 %v644, %v732
    %v750 = vadd.f32 %v649, %v732
    %v751 = vadd.f32 %v654, %v732
    %v752 = vadd.f32 %v659, %v732
    %v753 = vadd.f32 %v664, %v732
    %v754 = vadd.f32 %v669, %v732
    %v755 = vadd.f32 %v674, %v732
    %v756 = vadd.f32 %v679, %v732
    %v757 = vadd.f32 %v684, %v732
    %v758 = vadd.f32 %v689, %v732
    %v759 = vadd.f32 %v694, %v732
    %v760 = vadd.f32 %v699, %v732
    %v761 = vadd.f32 %v704, %v732
    %v762 = vadd.f32 %v709, %v732
    %v763 = vadd.f32 %v714, %v732
    %v764 = vadd.f32 %v719, %v732
    %v765 = vadd.f32 %v724, %v732
    %766 = vst [vmem:[#allocation2] sm:$0xff] %v734
    %767 = vst [vmem:[#allocation2 + $0x8] sm:$0xff] %v735
    %768 = vst [vmem:[#allocation2 + $0x10] sm:$0xff] %v736
    %769 = vst [vmem:[#allocation2 + $0x18] sm:$0xff] %v737
    %770 = vst [vmem:[#allocation2 + $0x20] sm:$0xff] %v738
    %771 = vst [vmem:[#allocation2 + $0x28] sm:$0xff] %v739
    %772 = vst [vmem:[#allocation2 + $0x30] sm:$0xff] %v740
    %773 = vst [vmem:[#allocation2 + $0x38] sm:$0xff] %v741
    %774 = vst [vmem:[#allocation2 + $0x40] sm:$0xff] %v742
    %775 = vst [vmem:[#allocation2 + $0x48] sm:$0xff] %v743
    %776 = vst [vmem:[#allocation2 + $0x50] sm:$0xff] %v744
    %777 = vst [vmem:[#allocation2 + $0x58] sm:$0xff] %v745
    %778 = vst [vmem:[#allocation2 + $0x60] sm:$0xff] %v746
    %779 = vst [vmem:[#allocation2 + $0x68] sm:$0xff] %v747
    %780 = vst [vmem:[#allocation2 + $0x70] sm:$0xff] %v748
    %781 = vst [vmem:[#allocation2 + $0x78] sm:$0xff] %v749
    %782 = vst [vmem:[#allocation2 + $0x80] sm:$0xff] %v750
    %783 = vst [vmem:[#allocation2 + $0x88] sm:$0xff] %v751
    %784 = vst [vmem:[#allocation2 + $0x90] sm:$0xff] %v752
    %785 = vst [vmem:[#allocation2 + $0x98] sm:$0xff] %v753
    %786 = vst [vmem:[#allocation2 + $0xa0] sm:$0xff] %v754
    %787 = vst [vmem:[#allocation2 + $0xa8] sm:$0xff] %v755
    %788 = vst [vmem:[#allocation2 + $0xb0] sm:$0xff] %v756
    %789 = vst [vmem:[#allocation2 + $0xb8] sm:$0xff] %v757
    %790 = vst [vmem:[#allocation2 + $0xc0] sm:$0xff] %v758
    %791 = vst [vmem:[#allocation2 + $0xc8] sm:$0xff] %v759
    %792 = vst [vmem:[#allocation2 + $0xd0] sm:$0xff] %v760
    %793 = vst [vmem:[#allocation2 + $0xd8] sm:$0xff] %v761
    %794 = vst [vmem:[#allocation2 + $0xe0] sm:$0xff] %v762
    %795 = vst [vmem:[#allocation2 + $0xe8] sm:$0xff] %v763
    %796 = vst [vmem:[#allocation2 + $0xf0] sm:$0xff] %v764
    %797 = vst [vmem:[#allocation2 + $0xf8] sm:$0xff] %v765
    // Predicated region
    $region22: #{tpu_custom_call.1} parent=1 // pred_check
      _
    $region23: #{tpu_custom_call.1} parent=1 // pred_check_branch
      %799 = sbr.rel (0) target = $region25
    $region24: #{tpu_custom_call.1} parent=1 // pred_region
      %s801 = ssub.s32 4096, 4096
      %802 = vsyncadd [#allocation3], %s801
      %s803 = sshll.u32 [#allocation2], 4
      %s804 = int_to_ptr.vmem [resolvable:$true] %s803
      %809 = dma.vmem_to_hbm [thread:$0]  %s804, 4096, %s5, [#allocation3], 128, 128, 8
    $region25: #{tpu_custom_call.1} parent=1 // pred_fallthru
      _
    // Predicated region
    $region26: #{tpu_custom_call.1} parent=1 // pred_check
      _
    $region27: #{tpu_custom_call.1} parent=1 // pred_check_branch
      %811 = sbr.rel (0) target = $region29
    $region28: #{tpu_custom_call.1} parent=1 // pred_region
      %812 = dma.done [#allocation3], 4096
    $region29: #{tpu_custom_call.1} parent=1 // pred_fallthru
      _
    %813 = vsyncpa [#allocation3], 1

</llo_original>
